<compile_context>
chip_gen: v7x
topology: tpu7x:2x2x1
jax: 0.10.0
libtpu: 0.0.40
codegen_flags: <defaults>
</compile_context>

<pallas_src>
import math
from functools import partial

import jax
import jax.numpy as jnp
from jax.experimental import pallas as pl
from jax.experimental.pallas import tpu as pltpu

K = 3          # kernel_size (PyTorch module default)
BN_EPS = 1e-5  # nn.BatchNorm2d default eps
_INV_SQRT2 = 1.0 / math.sqrt(2.0)
_SUBLANE = 8


def _cdiv(a, b):
    return -(-a // b)


def _round_up(x, m):
    return _cdiv(x, m) * m


def _gelu_exact(x):
    # matches nn.GELU(approximate='none')
    return 0.5 * x * (1.0 + jax.lax.erf(x * _INV_SQRT2))


def _dwconv_valid(x, w, wp):
    """3x3 depthwise 'valid' conv on an NHWC tile whose W dim (sublanes) is `wp` wide.

    Row taps are free leading-dim slices; the two column taps are sublane rotations
    (XLU slot), hoisted out of the row loop (2 rolls per conv instead of 6).  Roll
    wrap-around only pollutes columns >= wp - 2, which a valid conv output discards.
    Returns shape (b, h-2, wp, c); only columns < (#valid input cols - 2) are meaningful.
    """
    h = x.shape[1]
    h_out = h - (K - 1)
    shifted = (x,
               pltpu.roll(x, wp - 1, axis=2),   # out[:, :, j] = in[:, :, j + 1]  (j < wp-1)
               pltpu.roll(x, wp - 2, axis=2))   # out[:, :, j] = in[:, :, j + 2]  (j < wp-2)
    acc = None
    for kh in range(K):
        for kw in range(K):
            idx = kh * K + kw
            tap = w[idx:idx + 1, :]                              # (1, c) per-channel weight
            term = shifted[kw][:, kh:kh + h_out, :, :] * tap
            acc = term if acc is None else acc + term
    return acc


def _phase1_kernel(x_ref, w_ref, b_ref, y_ref, stats_ref, *scratch,
                   w_in, wp, w_valid, block_b, batch):
    """dwconv1 + bias + exact GELU + per-(B,C)-block partial BN statistics.

    x_ref:     (Bb, H, w_in, Cb)        f32   unpadded input tile
    w_ref:     (K*K, Cb)                f32   depthwise taps
    b_ref:     (1, Cb)                  f32
    y_ref:     (Bb, H-2, w_valid, Cb)   f32/bf16 compact intermediate
    stats_ref: (1, 2, Cb)               f32   [sum, sum_of_squares] over the valid window
    scratch:   optional (Bb, H, wp, Cb) f32 VMEM pad buffer (only when wp != w_in)
    """
    if wp != w_in:
        xp_ref, = scratch
        xp_ref[:, :, 0:w_in, :] = x_ref[...]   # sublane-aligned pad; pad columns are never
        x = xp_ref[...]                        # read by valid outputs / stats
    else:
        x = x_ref[...]

    c = x.shape[3]
    acc = _dwconv_valid(x, w_ref[...], wp)
    y = _gelu_exact(acc + b_ref[...])                       # fused bias + GELU epilogue

    # BN sums in f32 BEFORE the (possibly bf16) store of y.
    cmask = (jax.lax.broadcasted_iota(jnp.int32, (wp, c), 0) < w_valid
             ).reshape(1, 1, wp, c)
    ym = jnp.where(cmask, y, 0.0)
    s_row = jnp.sum(ym, axis=(1, 2))                        # (Bb, Cb)
    ss_row = jnp.sum(ym * ym, axis=(1, 2))
    if batch % block_b != 0:                                # ragged last batch tile: mask it
        valid_b = jnp.minimum(block_b, batch - pl.program_id(0) * block_b)
        rmask = jax.lax.broadcasted_iota(jnp.int32, (block_b, c), 0) < valid_b
        s_row = jnp.where(rmask, s_row, 0.0)
        ss_row = jnp.where(rmask, ss_row, 0.0)
    stats_ref[:, 0:1, :] = jnp.sum(s_row, axis=0, keepdims=True).reshape(1, 1, c)
    stats_ref[:, 1:2, :] = jnp.sum(ss_row, axis=0, keepdims=True).reshape(1, 1, c)

    y_ref[...] = y[:, :, 0:w_valid, :].astype(y_ref.dtype)


def _phase2_kernel(y_ref, scale_ref, shift_ref, w_ref, b_ref, o_ref, *scratch,
                   w_in, wp, w_out):
    """fused BatchNorm affine + dwconv2.

    y_ref:       (Bb, H1, w_in, Cb)   f32/bf16 compact intermediate
    scale/shift: (1, Cb)              f32   gamma*rsqrt(var+eps), beta - mean*scale
    w_ref:       (K*K, Cb)            f32
    b_ref:       (1, Cb)              f32
    o_ref:       (Bb, H1-2, w_out, Cb) f32
    scratch:     optional (Bb, H1, wp, Cb) f32 VMEM pad buffer (only when wp != w_in)
    """
    z0 = y_ref[...].astype(jnp.float32) * scale_ref[...] + shift_ref[...]   # BN as one FMA
    if wp != w_in:
        zp_ref, = scratch
        zp_ref[:, :, 0:w_in, :] = z0
        z = zp_ref[...]
    else:
        z = z0
    acc = _dwconv_valid(z, w_ref[...], wp) + b_ref[...]
    o_ref[...] = acc[:, :, 0:w_out, :]        # drop the invalid trailing columns once


def _vmem_budgets():
    """Generation-aware (activation_tile_budget_bytes, vmem_limit_bytes)."""
    try:
        cap = pltpu.get_tpu_info().vmem_capacity_bytes
    except Exception:
        cap = 64 << 20                        # conservative (v7x-sized) fallback
    if cap >= (100 << 20):                    # v5e / v6e: 128 MiB physical VMEM
        return 8 << 20, 96 << 20
    return 3 << 20, 44 << 20                  # v7x: 64 MiB physical VMEM


def lpi_forward(x_tokens, params, H, W, *, block_b=None, block_c=None,
                y_dtype=jnp.bfloat16):
    """x_tokens: (B, N, C) with N == H*W.  Returns (B, (H-4)*(W-4), C) for K=3, pad=0."""
    B, N, C = x_tokens.shape
    assert N == H * W
    w1, b1, gamma, beta, w2, b2 = params

    H1, W1 = H - (K - 1), W - (K - 1)
    H2, W2 = H1 - (K - 1), W1 - (K - 1)
    assert H2 > 0 and W2 > 0

    Wp = _round_up(W, _SUBLANE)       # sublane-aligned conv widths (padded in VMEM only)
    Wp1 = _round_up(W1, _SUBLANE)

    # Token2Patch: free reshape to NHWC (C on lanes, W on sublanes); no HBM-side padding.
    x = x_tokens.reshape(B, H, W, C).astype(jnp.float32)

    # Depthwise taps flattened to (K*K, C); per-channel vectors as (1, C).
    w1f = w1.reshape(K * K, C).astype(jnp.float32)
    w2f = w2.reshape(K * K, C).astype(jnp.float32)
    b1r = b1.reshape(1, C).astype(jnp.float32)
    b2r = b2.reshape(1, C).astype(jnp.float32)

    tile_budget, vmem_limit = _vmem_budgets()

    # Channel tiling: the op is channel-separable, so C-tiles add halo-free grid steps and
    # keep stores lane-dense for XCiT widths 128/256/384/512.
    if block_c is None:
        block_c = 128 if (C % 128 == 0 and C > 128) else C
    assert C % block_c == 0
    nc = C // block_c

    # Batch tiling: cdiv + in-kernel masking (no divisor constraint).  Target enough grid
    # steps to pipeline / shard across TensorCores while keeping the f32 input tile (plus
    # ~4-5x in-kernel temporaries) inside the generation's VMEM budget.
    per_b = H * Wp * block_c * 4
    if block_b is None:
        bb_budget = max(1, tile_budget // per_b)
        nb_min = min(B, max(1, _cdiv(8, nc)))          # aim for >= ~8 total grid steps
        nb = max(nb_min, _cdiv(B, bb_budget))
        block_b = _cdiv(B, nb)
    block_b = max(1, min(block_b, B))
    nb = _cdiv(B, block_b)
    # TODO(synk): for B == 1 with very large H*W, add an H-halo grid axis (element-indexed
    # blocks) so a single image still yields multiple pipeline steps.

    cp = pltpu.CompilerParams(dimension_semantics=("parallel", "parallel"),
                              vmem_limit_bytes=vmem_limit)

    # ---- phase 1: dwconv1 + bias + exact GELU + per-block partial BN statistics ----
    scratch1 = [pltpu.VMEM((block_b, H, Wp, block_c), jnp.float32)] if Wp != W else []
    y, stats = pl.pallas_call(
        partial(_phase1_kernel, w_in=W, wp=Wp, w_valid=W1, block_b=block_b, batch=B),
        grid=(nb, nc),
        in_specs=[
            pl.BlockSpec((block_b, H, W, block_c), lambda i, j: (i, 0, 0, j)),
            pl.BlockSpec((K * K, block_c), lambda i, j: (0, j)),
            pl.BlockSpec((1, block_c), lambda i, j: (0, j)),
        ],
        out_specs=(
            pl.BlockSpec((block_b, H1, W1, block_c), lambda i, j: (i, 0, 0, j)),
            pl.BlockSpec((1, 2, block_c), lambda i, j: (i, 0, j)),
        ),
        out_shape=(
            jax.ShapeDtypeStruct((B, H1, W1, C), y_dtype),
            jax.ShapeDtypeStruct((nb, 2, C), jnp.float32),
        ),
        scratch_shapes=scratch1,
        compiler_params=cp,
    )(x, w1f, b1r)

    # ---- tiny XLA reduce: training-mode (biased) BatchNorm2d statistics ----
    # TODO(synk): one-pass E[x^2]-E[x]^2 can cancel for large-mean activations; switch to
    # per-block shifted sums if tighter parity with PyTorch BN is ever required.
    n = float(B * H1 * W1)
    tot = jnp.sum(stats, axis=0)                      # (2, C)
    mean = tot[0] / n
    var = jnp.maximum(tot[1] / n - mean * mean, 0.0)
    inv_std = jax.lax.rsqrt(var + BN_EPS)
    g = gamma.reshape(C).astype(jnp.float32)
    bt = beta.reshape(C).astype(jnp.float32)
    bn_scale = (g * inv_std).reshape(1, C)
    bn_shift = (bt - mean * g * inv_std).reshape(1, C)

    # ---- phase 2: fused BN affine + dwconv2 ----
    # TODO(synk): on HBM-bound v5e a stats-only pass 1 + recompute-in-pass-2 variant would
    # drop the y round trip entirely; kept two-pass here since v6e/v7x are VALU-bound.
    scratch2 = [pltpu.VMEM((block_b, H1, Wp1, block_c), jnp.float32)] if Wp1 != W1 else []
    out = pl.pallas_call(
        partial(_phase2_kernel, w_in=W1, wp=Wp1, w_out=W2),
        grid=(nb, nc),
        in_specs=[
            pl.BlockSpec((block_b, H1, W1, block_c), lambda i, j: (i, 0, 0, j)),
            pl.BlockSpec((1, block_c), lambda i, j: (0, j)),
            pl.BlockSpec((1, block_c), lambda i, j: (0, j)),
            pl.BlockSpec((K * K, block_c), lambda i, j: (0, j)),
            pl.BlockSpec((1, block_c), lambda i, j: (0, j)),
        ],
        out_specs=pl.BlockSpec((block_b, H2, W2, block_c), lambda i, j: (i, 0, 0, j)),
        out_shape=jax.ShapeDtypeStruct((B, H2, W2, C), jnp.float32),
        scratch_shapes=scratch2,
        compiler_params=cp,
    )(y, bn_scale, bn_shift, w2f, b2r)

    # Patch2Token (free reshape of a contiguous NHWC block)
    return out.reshape(B, H2 * W2, C)


def _lpi_reference(x_tokens, params, H, W):
    """Pure-JAX reference with identical math (for correctness check)."""
    B, N, C = x_tokens.shape
    w1, b1, gamma, beta, w2, b2 = params
    x = x_tokens.reshape(B, H, W, C).astype(jnp.float32)

    def dwconv(z, w, b):
        Bz, Hz, Wz, Cz = z.shape
        Ho, Wo = Hz - (K - 1), Wz - (K - 1)
        acc = jnp.zeros((Bz, Ho, Wo, Cz), jnp.float32)
        for kh in range(K):
            for kw in range(K):
                acc = acc + z[:, kh:kh + Ho, kw:kw + Wo, :] * w[kh, kw, :]
        return acc + b

    y = dwconv(x, w1, b1)
    y = 0.5 * y * (1.0 + jax.lax.erf(y * _INV_SQRT2))
    n = float(y.shape[0] * y.shape[1] * y.shape[2])
    mean = jnp.sum(y, axis=(0, 1, 2), keepdims=True) / n
    var = jnp.sum((y - mean) ** 2, axis=(0, 1, 2), keepdims=True) / n
    y = (y - mean) * jax.lax.rsqrt(var + BN_EPS) * gamma.reshape(1, 1, 1, C) \
        + beta.reshape(1, 1, 1, C)
    y = dwconv(y, w2, b2)
    B2, H2, W2, C2 = y.shape
    return y.reshape(B2, H2 * W2, C2)


if __name__ == "__main__":
    def make_params(key, C):
        k1, kb1, k2, kb2, kg, kb = jax.random.split(key, 6)
        # Depthwise Conv2d weights in PyTorch are (C, 1, K, K); we keep them as (K, K, C).
        w1 = 0.2 * jax.random.normal(k1, (K, K, C), jnp.float32)
        b1 = 0.1 * jax.random.normal(kb1, (1, C), jnp.float32)
        w2 = 0.2 * jax.random.normal(k2, (K, K, C), jnp.float32)
        b2 = 0.1 * jax.random.normal(kb2, (1, C), jnp.float32)
        gamma = 1.0 + 0.1 * jax.random.normal(kg, (1, C), jnp.float32)
        beta = 0.1 * jax.random.normal(kb, (1, C), jnp.float32)
        return (w1, b1, gamma, beta, w2, b2)

    key = jax.random.PRNGKey(0)

    # case 1: W not a multiple of 8 (in-kernel VMEM pad path), ragged batch tile
    #         (B=3, block_b=2 -> last tile half-valid), bf16 intermediate (default).
    B, C, H, W = 3, 16, 10, 10
    kx, kp, key = jax.random.split(key, 3)
    x_tokens = jax.random.normal(kx, (B, H * W, C), jnp.float32)
    params = make_params(kp, C)
    out = jax.block_until_ready(lpi_forward(x_tokens, params, H, W, block_b=2))
    ref = _lpi_reference(x_tokens, params, H, W)
    assert out.shape == ref.shape == (B, (H - 4) * (W - 4), C)
    assert jnp.allclose(out, ref, rtol=2e-2, atol=2e-2), "case 1 (bf16 y) mismatch"

    # case 2: same problem, f32 intermediate, auto tiling -> tight tolerance.
    out32 = jax.block_until_ready(lpi_forward(x_tokens, params, H, W, y_dtype=jnp.float32))
    assert jnp.allclose(out32, ref, rtol=2e-3, atol=2e-3), "case 2 (f32 y) mismatch"

    # case 3: lane-tiled channels (C=256 -> two 128-wide C tiles), aligned W,
    #         phase-2 VMEM pad path (W1=6), f32 intermediate.
    B, C, H, W = 2, 256, 8, 8
    kx, kp, key = jax.random.split(key, 3)
    x_tokens = jax.random.normal(kx, (B, H * W, C), jnp.float32)
    params = make_params(kp, C)
    out = jax.block_until_ready(lpi_forward(x_tokens, params, H, W, y_dtype=jnp.float32))
    ref = _lpi_reference(x_tokens, params, H, W)
    assert out.shape == ref.shape == (B, (H - 4) * (W - 4), C)
    assert jnp.allclose(out, ref, rtol=2e-3, atol=2e-3), "case 3 (C-tiled) mismatch"

    print("KERNEL_OK")
</pallas_src>

<mosaic_0001>
module attributes {stable_mosaic.version = 11 : i64} {
  func.func @_phase1_kernel(%arg0: i32, %arg1: i32, %arg2: memref<2x10x10x16xf32, #tpu.memory_space<vmem>>, %arg3: memref<9x16xf32, #tpu.memory_space<vmem>>, %arg4: memref<1x16xf32, #tpu.memory_space<vmem>>, %arg5: memref<2x8x8x16xbf16, #tpu.memory_space<vmem>>, %arg6: memref<1x2x16xf32, #tpu.memory_space<vmem>>, %arg7: memref<2x10x16x16xf32, #tpu.memory_space<vmem>>) attributes {dimension_semantics = [#tpu.dimension_semantics<parallel>, #tpu.dimension_semantics<parallel>], iteration_bounds = array<i64: 2, 1>, scalar_prefetch = 0 : i64, scratch_operands = 1 : i64, tpu.core_type = #tpu.core_type<tc>, window_params = [{transform_indices = @transform_0, window_bounds = array<i64: 2, 10, 10, 16>}, {transform_indices = @transform_1, window_bounds = array<i64: 9, 16>}, {transform_indices = @transform_2, window_bounds = array<i64: 1, 16>}, {transform_indices = @transform_3, window_bounds = array<i64: 2, 8, 8, 16>}, {transform_indices = @transform_4, window_bounds = array<i64: 1, 2, 16>}]} {
    %c0 = arith.constant 0 : index
    %c0_0 = arith.constant 0 : index
    %c0_1 = arith.constant 0 : index
    %c0_2 = arith.constant 0 : index
    %0 = vector.load %arg2[%c0, %c0_0, %c0_1, %c0_2] : memref<2x10x10x16xf32, #tpu.memory_space<vmem>>, vector<2x10x10x16xf32>
    %c0_3 = arith.constant 0 : index
    %c0_4 = arith.constant 0 : index
    %c0_5 = arith.constant 0 : index
    %c0_6 = arith.constant 0 : index
    %1 = vector.load %arg7[%c0_3, %c0_4, %c0_5, %c0_6] : memref<2x10x16x16xf32, #tpu.memory_space<vmem>>, vector<2x10x10x16xf32>
    tpu.vector_store %arg7[%c0_3, %c0_4, %c0_5, %c0_6], %0 {strides = array<i32>} : memref<2x10x16x16xf32, #tpu.memory_space<vmem>>, vector<2x10x10x16xf32>,
    %c0_7 = arith.constant 0 : index
    %c0_8 = arith.constant 0 : index
    %c0_9 = arith.constant 0 : index
    %c0_10 = arith.constant 0 : index
    %2 = vector.load %arg7[%c0_7, %c0_8, %c0_9, %c0_10] : memref<2x10x16x16xf32, #tpu.memory_space<vmem>>, vector<2x10x16x16xf32>
    %c0_11 = arith.constant 0 : index
    %c0_12 = arith.constant 0 : index
    %3 = vector.load %arg3[%c0_11, %c0_12] : memref<9x16xf32, #tpu.memory_space<vmem>>, vector<9x16xf32>
    %c15_i32 = arith.constant 15 : i32
    %4 = tpu.dynamic_rotate %2 by %c15_i32 dim 2 : vector<2x10x16x16xf32>, i32 -> vector<2x10x16x16xf32>
    %c14_i32 = arith.constant 14 : i32
    %5 = tpu.dynamic_rotate %2 by %c14_i32 dim 2 : vector<2x10x16x16xf32>, i32 -> vector<2x10x16x16xf32>
    %6 = vector.extract_strided_slice %3 {offsets = [0, 0], sizes = [1, 16], strides = [1, 1]} : vector<9x16xf32> to vector<1x16xf32>
    %7 = vector.extract_strided_slice %2 {offsets = [0, 0, 0, 0], sizes = [2, 8, 16, 16], strides = [1, 1, 1, 1]} : vector<2x10x16x16xf32> to vector<2x8x16x16xf32>
    %8 = vector.shape_cast %6 : vector<1x16xf32> to vector<1x1x1x16xf32>
    %9 = vector.broadcast %8 : vector<1x1x1x16xf32> to vector<2x8x16x16xf32>
    %10 = arith.mulf %7, %9 : vector<2x8x16x16xf32>
    %11 = vector.extract_strided_slice %3 {offsets = [1, 0], sizes = [1, 16], strides = [1, 1]} : vector<9x16xf32> to vector<1x16xf32>
    %12 = vector.extract_strided_slice %4 {offsets = [0, 0, 0, 0], sizes = [2, 8, 16, 16], strides = [1, 1, 1, 1]} : vector<2x10x16x16xf32> to vector<2x8x16x16xf32>
    %13 = vector.shape_cast %11 : vector<1x16xf32> to vector<1x1x1x16xf32>
    %14 = vector.broadcast %13 : vector<1x1x1x16xf32> to vector<2x8x16x16xf32>
    %15 = arith.mulf %12, %14 : vector<2x8x16x16xf32>
    %16 = arith.addf %10, %15 : vector<2x8x16x16xf32>
    %17 = vector.extract_strided_slice %3 {offsets = [2, 0], sizes = [1, 16], strides = [1, 1]} : vector<9x16xf32> to vector<1x16xf32>
    %18 = vector.extract_strided_slice %5 {offsets = [0, 0, 0, 0], sizes = [2, 8, 16, 16], strides = [1, 1, 1, 1]} : vector<2x10x16x16xf32> to vector<2x8x16x16xf32>
    %19 = vector.shape_cast %17 : vector<1x16xf32> to vector<1x1x1x16xf32>
    %20 = vector.broadcast %19 : vector<1x1x1x16xf32> to vector<2x8x16x16xf32>
    %21 = arith.mulf %18, %20 : vector<2x8x16x16xf32>
    %22 = arith.addf %16, %21 : vector<2x8x16x16xf32>
    %23 = vector.extract_strided_slice %3 {offsets = [3, 0], sizes = [1, 16], strides = [1, 1]} : vector<9x16xf32> to vector<1x16xf32>
    %24 = vector.extract_strided_slice %2 {offsets = [0, 1, 0, 0], sizes = [2, 8, 16, 16], strides = [1, 1, 1, 1]} : vector<2x10x16x16xf32> to vector<2x8x16x16xf32>
    %25 = vector.shape_cast %23 : vector<1x16xf32> to vector<1x1x1x16xf32>
    %26 = vector.broadcast %25 : vector<1x1x1x16xf32> to vector<2x8x16x16xf32>
    %27 = arith.mulf %24, %26 : vector<2x8x16x16xf32>
    %28 = arith.addf %22, %27 : vector<2x8x16x16xf32>
    %29 = vector.extract_strided_slice %3 {offsets = [4, 0], sizes = [1, 16], strides = [1, 1]} : vector<9x16xf32> to vector<1x16xf32>
    %30 = vector.extract_strided_slice %4 {offsets = [0, 1, 0, 0], sizes = [2, 8, 16, 16], strides = [1, 1, 1, 1]} : vector<2x10x16x16xf32> to vector<2x8x16x16xf32>
    %31 = vector.shape_cast %29 : vector<1x16xf32> to vector<1x1x1x16xf32>
    %32 = vector.broadcast %31 : vector<1x1x1x16xf32> to vector<2x8x16x16xf32>
    %33 = arith.mulf %30, %32 : vector<2x8x16x16xf32>
    %34 = arith.addf %28, %33 : vector<2x8x16x16xf32>
    %35 = vector.extract_strided_slice %3 {offsets = [5, 0], sizes = [1, 16], strides = [1, 1]} : vector<9x16xf32> to vector<1x16xf32>
    %36 = vector.extract_strided_slice %5 {offsets = [0, 1, 0, 0], sizes = [2, 8, 16, 16], strides = [1, 1, 1, 1]} : vector<2x10x16x16xf32> to vector<2x8x16x16xf32>
    %37 = vector.shape_cast %35 : vector<1x16xf32> to vector<1x1x1x16xf32>
    %38 = vector.broadcast %37 : vector<1x1x1x16xf32> to vector<2x8x16x16xf32>
    %39 = arith.mulf %36, %38 : vector<2x8x16x16xf32>
    %40 = arith.addf %34, %39 : vector<2x8x16x16xf32>
    %41 = vector.extract_strided_slice %3 {offsets = [6, 0], sizes = [1, 16], strides = [1, 1]} : vector<9x16xf32> to vector<1x16xf32>
    %42 = vector.extract_strided_slice %2 {offsets = [0, 2, 0, 0], sizes = [2, 8, 16, 16], strides = [1, 1, 1, 1]} : vector<2x10x16x16xf32> to vector<2x8x16x16xf32>
    %43 = vector.shape_cast %41 : vector<1x16xf32> to vector<1x1x1x16xf32>
    %44 = vector.broadcast %43 : vector<1x1x1x16xf32> to vector<2x8x16x16xf32>
    %45 = arith.mulf %42, %44 : vector<2x8x16x16xf32>
    %46 = arith.addf %40, %45 : vector<2x8x16x16xf32>
    %47 = vector.extract_strided_slice %3 {offsets = [7, 0], sizes = [1, 16], strides = [1, 1]} : vector<9x16xf32> to vector<1x16xf32>
    %48 = vector.extract_strided_slice %4 {offsets = [0, 2, 0, 0], sizes = [2, 8, 16, 16], strides = [1, 1, 1, 1]} : vector<2x10x16x16xf32> to vector<2x8x16x16xf32>
    %49 = vector.shape_cast %47 : vector<1x16xf32> to vector<1x1x1x16xf32>
    %50 = vector.broadcast %49 : vector<1x1x1x16xf32> to vector<2x8x16x16xf32>
    %51 = arith.mulf %48, %50 : vector<2x8x16x16xf32>
    %52 = arith.addf %46, %51 : vector<2x8x16x16xf32>
    %53 = vector.extract_strided_slice %3 {offsets = [8, 0], sizes = [1, 16], strides = [1, 1]} : vector<9x16xf32> to vector<1x16xf32>
    %54 = vector.extract_strided_slice %5 {offsets = [0, 2, 0, 0], sizes = [2, 8, 16, 16], strides = [1, 1, 1, 1]} : vector<2x10x16x16xf32> to vector<2x8x16x16xf32>
    %55 = vector.shape_cast %53 : vector<1x16xf32> to vector<1x1x1x16xf32>
    %56 = vector.broadcast %55 : vector<1x1x1x16xf32> to vector<2x8x16x16xf32>
    %57 = arith.mulf %54, %56 : vector<2x8x16x16xf32>
    %58 = arith.addf %52, %57 : vector<2x8x16x16xf32>
    %c0_13 = arith.constant 0 : index
    %c0_14 = arith.constant 0 : index
    %59 = vector.load %arg4[%c0_13, %c0_14] : memref<1x16xf32, #tpu.memory_space<vmem>>, vector<1x16xf32>
    %60 = vector.shape_cast %59 : vector<1x16xf32> to vector<1x1x1x16xf32>
    %61 = vector.broadcast %60 : vector<1x1x1x16xf32> to vector<2x8x16x16xf32>
    %62 = arith.addf %58, %61 : vector<2x8x16x16xf32>
    %cst = arith.constant 5.000000e-01 : f32
    %63 = vector.broadcast %cst : f32 to vector<2x8x16x16xf32>
    %64 = arith.mulf %63, %62 : vector<2x8x16x16xf32>
    %cst_15 = arith.constant 0.707106769 : f32
    %65 = vector.broadcast %cst_15 : f32 to vector<2x8x16x16xf32>
    %66 = arith.mulf %62, %65 : vector<2x8x16x16xf32>
    %67 = math.erf %66 : vector<2x8x16x16xf32>
    %cst_16 = arith.constant 1.000000e+00 : f32
    %68 = vector.broadcast %cst_16 : f32 to vector<2x8x16x16xf32>
    %69 = arith.addf %68, %67 : vector<2x8x16x16xf32>
    %70 = arith.mulf %64, %69 : vector<2x8x16x16xf32>
    %71 = tpu.iota {dimensions = array<i32: 0>} : vector<16x16xi32>
    %c8_i32 = arith.constant 8 : i32
    %72 = vector.broadcast %c8_i32 : i32 to vector<16x16xi32>
    %73 = arith.cmpi slt, %71, %72 : vector<16x16xi32>
    %74 = vector.shape_cast %73 : vector<16x16xi1> to vector<1x1x16x16xi1>
    %cst_17 = arith.constant 0.000000e+00 : f32
    %75 = vector.shape_cast %74 : vector<1x1x16x16xi1> to vector<1x1x16x16xi1>
    %76 = vector.broadcast %75 : vector<1x1x16x16xi1> to vector<2x8x16x16xi1>
    %77 = vector.broadcast %cst_17 : f32 to vector<2x8x16x16xf32>
    %78 = arith.select %76, %70, %77 : vector<2x8x16x16xi1>, vector<2x8x16x16xf32>
    %cst_18 = arith.constant dense<0.000000e+00> : vector<2x16xf32>
    %79 = vector.multi_reduction <add>, %78, %cst_18 [1, 2] : vector<2x8x16x16xf32> to vector<2x16xf32>
    %80 = arith.mulf %78, %78 : vector<2x8x16x16xf32>
    %cst_19 = arith.constant dense<0.000000e+00> : vector<2x16xf32>
    %81 = vector.multi_reduction <add>, %80, %cst_19 [1, 2] : vector<2x8x16x16xf32> to vector<2x16xf32>
    %c2_i32 = arith.constant 2 : i32
    %82 = arith.muli %arg0, %c2_i32 : i32
    %c3_i32 = arith.constant 3 : i32
    %83 = arith.subi %c3_i32, %82 : i32
    %c2_i32_20 = arith.constant 2 : i32
    %84 = arith.minsi %c2_i32_20, %83 : i32
    %85 = tpu.iota {dimensions = array<i32: 0>} : vector<2x16xi32>
    %86 = vector.broadcast %84 : i32 to vector<2x16xi32>
    %87 = arith.cmpi slt, %85, %86 : vector<2x16xi32>
    %cst_21 = arith.constant 0.000000e+00 : f32
    %88 = vector.broadcast %cst_21 : f32 to vector<2x16xf32>
    %89 = arith.select %87, %79, %88 : vector<2x16xi1>, vector<2x16xf32>
    %cst_22 = arith.constant 0.000000e+00 : f32
    %90 = vector.broadcast %cst_22 : f32 to vector<2x16xf32>
    %91 = arith.select %87, %81, %90 : vector<2x16xi1>, vector<2x16xf32>
    %cst_23 = arith.constant dense<0.000000e+00> : vector<16xf32>
    %92 = vector.multi_reduction <add>, %89, %cst_23 [0] : vector<2x16xf32> to vector<16xf32>
    %93 = vector.shape_cast %92 : vector<16xf32> to vector<1x16xf32>
    %94 = vector.shape_cast %93 : vector<1x16xf32> to vector<1x1x16xf32>
    %c0_24 = arith.constant 0 : index
    %c0_25 = arith.constant 0 : index
    %c0_26 = arith.constant 0 : index
    %95 = vector.load %arg6[%c0_24, %c0_25, %c0_26] : memref<1x2x16xf32, #tpu.memory_space<vmem>>, vector<1x1x16xf32>
    tpu.vector_store %arg6[%c0_24, %c0_25, %c0_26], %94 {strides = array<i32>} : memref<1x2x16xf32, #tpu.memory_space<vmem>>, vector<1x1x16xf32>,
    %cst_27 = arith.constant dense<0.000000e+00> : vector<16xf32>
    %96 = vector.multi_reduction <add>, %91, %cst_27 [0] : vector<2x16xf32> to vector<16xf32>
    %97 = vector.shape_cast %96 : vector<16xf32> to vector<1x16xf32>
    %98 = vector.shape_cast %97 : vector<1x16xf32> to vector<1x1x16xf32>
    %c0_28 = arith.constant 0 : index
    %c1 = arith.constant 1 : index
    %c0_29 = arith.constant 0 : index
    %99 = vector.load %arg6[%c0_28, %c1, %c0_29] : memref<1x2x16xf32, #tpu.memory_space<vmem>>, vector<1x1x16xf32>
    tpu.vector_store %arg6[%c0_28, %c1, %c0_29], %98 {strides = array<i32>} : memref<1x2x16xf32, #tpu.memory_space<vmem>>, vector<1x1x16xf32>,
    %100 = vector.extract_strided_slice %70 {offsets = [0, 0, 0, 0], sizes = [2, 8, 8, 16], strides = [1, 1, 1, 1]} : vector<2x8x16x16xf32> to vector<2x8x8x16xf32>
    %101 = arith.truncf %100 : vector<2x8x8x16xf32> to vector<2x8x8x16xbf16>
    %c0_30 = arith.constant 0 : index
    %c0_31 = arith.constant 0 : index
    %c0_32 = arith.constant 0 : index
    %c0_33 = arith.constant 0 : index
    %102 = vector.load %arg5[%c0_30, %c0_31, %c0_32, %c0_33] : memref<2x8x8x16xbf16, #tpu.memory_space<vmem>>, vector<2x8x8x16xbf16>
    tpu.vector_store %arg5[%c0_30, %c0_31, %c0_32, %c0_33], %101 {strides = array<i32>} : memref<2x8x8x16xbf16, #tpu.memory_space<vmem>>, vector<2x8x8x16xbf16>,
    return
  }
  func.func @transform_0(%arg0: i32, %arg1: i32) -> (i32, i32, i32, i32) {
    %c0_i32 = arith.constant 0 : i32
    %c0_i32_0 = arith.constant 0 : i32
    %c0_i32_1 = arith.constant 0 : i32
    return %arg0, %c0_i32, %c0_i32_0, %arg1 : i32, i32, i32, i32
  }
  func.func @transform_1(%arg0: i32, %arg1: i32) -> (i32, i32) {
    %c0_i32 = arith.constant 0 : i32
    %c0_i32_0 = arith.constant 0 : i32
    return %c0_i32, %arg1 : i32, i32
  }
  func.func @transform_2(%arg0: i32, %arg1: i32) -> (i32, i32) {
    %c0_i32 = arith.constant 0 : i32
    %c0_i32_0 = arith.constant 0 : i32
    return %c0_i32, %arg1 : i32, i32
  }
  func.func @transform_3(%arg0: i32, %arg1: i32) -> (i32, i32, i32, i32) {
    %c0_i32 = arith.constant 0 : i32
    %c0_i32_0 = arith.constant 0 : i32
    %c0_i32_1 = arith.constant 0 : i32
    return %arg0, %c0_i32, %c0_i32_0, %arg1 : i32, i32, i32, i32
  }
  func.func @transform_4(%arg0: i32, %arg1: i32) -> (i32, i32, i32) {
    %c0_i32 = arith.constant 0 : i32
    %c0_i32_0 = arith.constant 0 : i32
    return %arg0, %c0_i32, %arg1 : i32, i32, i32
  }
}

</mosaic_0001>

<llo_original>
// kernel: tpu_custom_call.1
$region0: #{tpu_custom_call.1}
  #allocation0 [shape = 'u32[]', space=smem, size = 0x4, offset = 0x4, fixed_abs, tag = 'smem constant byte address 0x4 - core index']
  #allocation1 [shape = 'u32[144,128]{1,0:T(1,128)}', space=vmem, size = 0x12000, scoped, tag = 'internal scratch']
  #allocation2 [shape = 'f32[2,10,16,16]{3,2,1,0:T(8,128)}', space=vmem, size = 0x28000, scoped, tag = 'scratch operand']
  %s0 = inlined_call_operand.vmem [shape: f32[3,10,10,16], index: 0, kind: input, shape index: {}]
  %s1 = inlined_call_operand.vmem [shape: f32[9,16], index: 1, kind: input, shape index: {}]
  %s2 = inlined_call_operand.vmem [shape: f32[1,16], index: 2, kind: input, shape index: {}]
  %s3 = inlined_call_operand.hbm [shape: bf16[3,8,8,16], index: 3, kind: output, shape index: {0}]
  %s4 = inlined_call_operand.hbm [shape: f32[2,2,16], index: 4, kind: output, shape index: {1}]
  %5 = xla_tuple %s3, %s4
  %s6 = sld [smem:[#allocation0]]
  $region53: #{tpu_custom_call.1} parent=0
    _
  %s8 = ssub.s32 1, %s6
  %s9 = scalar_select 0, %s8, %s6
  $region1: #{tpu_custom_call.1} parent=0
    #allocation3 [shape = 'u8[65536]{0}', space=vmem, size = 0x10000, scoped, tag = 'output window, operand 0']
    #allocation4 [shape = 's32[2]{0}', space=sflag, size = 0x8, scoped, tag = 'scoped memory for tpu_custom_call.1']
    #allocation5 [shape = 'u8[2048]{0}', space=vmem, size = 0x800, scoped, tag = 'output window, operand 1']
    #allocation6 [shape = 's32[2]{0}', space=sflag, size = 0x8, scoped, tag = 'scoped memory for tpu_custom_call.1']
    %10 = vsyncpa [#allocation4], 0
    %s11 = scalar_lea.sflag [#allocation4], 1
    %12 = vsyncpa %s11, 0
    %13 = vsyncpa [#allocation6], 0
    %s14 = scalar_lea.sflag [#allocation6], 1
    %15 = vsyncpa %s14, 0
    loop: start=0, step=1, limit=4
    $region2: #{tpu_custom_call.1} parent=1 // loop_pre_header
      _
    $region3: #{tpu_custom_call.1} parent=1 // loop_header
      %s17 = sphi 0, %s21
      %p18 = scmp.ge.s32.totalorder %s17, 4
      %s24 = sphi 0, %s36
      %s25 = sphi 0, %s32
      %s26 = sphi 0, %s24
      %s27 = sphi 0, %s25
      %s28 = sphi 0, %s26
      %s29 = sphi 0, %s27
      %s41 = sphi 0, %s43
      %s44 = sphi 0, %s41
      %s45 = sphi 0, %s44
      %s61 = sphi 0, %s45
      %s67 = sphi 0, %s69
      %s70 = sphi 0, %s67
      %s71 = sphi 0, %s70
      %s87 = sphi 0, %s71
      %s93 = sphi 0, %s95
      %s96 = sphi 0, %s93
      %s97 = sphi 0, %s96
      %s113 = sphi 0, %s97
      %s121 = sphi 0, %s123
      %s124 = sphi 0, %s121
      %s125 = sphi 0, %s124
      %s141 = sphi 0, %s125
      %s149 = sphi 0, %s151
      %s152 = sphi 0, %s149
      %s153 = sphi 0, %s152
      %s169 = sphi 0, %s153
    $region4: #{tpu_custom_call.1} parent=1 // loop_header_branch
      %20 = sbr.rel (%p18) target = $region8
    $region5: #{tpu_custom_call.1} parent=1 // loop_body
      %s22 = ssub.s32 %s17, 1
      %s23 = ssub.s32 %s17, 2
      %s30 = sadd.s32 1, %s25
      %p31 = scmp.ge.s32.totalorder %s30, 1
      %s32 = scalar_select %p31, 0, %s30
      %s33 = sadd.s32 1, %s24
      %s34 = scalar_select %p31, %s33, %s24
      %p35 = scmp.ge.s32.totalorder %s34, 2
      %s36 = scalar_select %p35, 0, %s34
      %s37 = ssub.s32 %s24, %s36
      %s38 = ssub.s32 %s25, %s32
      %s39 = sor.u32 %s37, %s38
      %p40 = scmp.eq.s32.totalorder %s39, 0
      %s42 = sadd.s32 %s41, 1
      %s43 = scalar_select %p40, %s41, %s42
      %p46 = pneg %p40
      %p47 = scmp.eq.s32.totalorder %s17, 1
      %p48 = por %p46, %p47
      %p49 = scmp.ne.s32.totalorder %s41, %s44
      %p50 = scmp.eq.s32.totalorder %s17, 0
      %p51 = por %p49, %p50
      %p52 = scmp.ne.s32.totalorder %s41, %s44
      %p53 = scmp.eq.s32.totalorder %s22, 1
      %p54 = por %p52, %p53
      %p55 = scmp.ne.s32.totalorder %s44, %s45
      %p56 = scmp.eq.s32.totalorder %s22, 0
      %p57 = por %p55, %p56
      %p58 = scmp.ne.s32.totalorder %s44, %s45
      %p59 = scmp.eq.s32.totalorder %s23, 1
      %p60 = por %p58, %p59
      %p62 = scmp.ne.s32.totalorder %s45, %s61
      %p63 = scmp.eq.s32.totalorder %s23, 0
      %p64 = por %p62, %p63
      %s65 = ssub.s32 %s25, %s32
      %p66 = scmp.eq.s32.totalorder %s65, 0
      %s68 = sadd.s32 %s67, 1
      %s69 = scalar_select %p66, %s67, %s68
      %p72 = pneg %p66
      %p73 = scmp.eq.s32.totalorder %s17, 1
      %p74 = por %p72, %p73
      %p75 = scmp.ne.s32.totalorder %s67, %s70
      %p76 = scmp.eq.s32.totalorder %s17, 0
      %p77 = por %p75, %p76
      %p78 = scmp.ne.s32.totalorder %s67, %s70
      %p79 = scmp.eq.s32.totalorder %s22, 1
      %p80 = por %p78, %p79
      %p81 = scmp.ne.s32.totalorder %s70, %s71
      %p82 = scmp.eq.s32.totalorder %s22, 0
      %p83 = por %p81, %p82
      %p84 = scmp.ne.s32.totalorder %s70, %s71
      %p85 = scmp.eq.s32.totalorder %s23, 1
      %p86 = por %p84, %p85
      %p88 = scmp.ne.s32.totalorder %s71, %s87
      %p89 = scmp.eq.s32.totalorder %s23, 0
      %p90 = por %p88, %p89
      %s91 = ssub.s32 %s25, %s32
      %p92 = scmp.eq.s32.totalorder %s91, 0
      %s94 = sadd.s32 %s93, 1
      %s95 = scalar_select %p92, %s93, %s94
      %p98 = pneg %p92
      %p99 = scmp.eq.s32.totalorder %s17, 1
      %p100 = por %p98, %p99
      %p101 = scmp.ne.s32.totalorder %s93, %s96
      %p102 = scmp.eq.s32.totalorder %s17, 0
      %p103 = por %p101, %p102
      %p104 = scmp.ne.s32.totalorder %s93, %s96
      %p105 = scmp.eq.s32.totalorder %s22, 1
      %p106 = por %p104, %p105
      %p107 = scmp.ne.s32.totalorder %s96, %s97
      %p108 = scmp.eq.s32.totalorder %s22, 0
      %p109 = por %p107, %p108
      %p110 = scmp.ne.s32.totalorder %s96, %s97
      %p111 = scmp.eq.s32.totalorder %s23, 1
      %p112 = por %p110, %p111
      %p114 = scmp.ne.s32.totalorder %s97, %s113
      %p115 = scmp.eq.s32.totalorder %s23, 0
      %p116 = por %p114, %p115
      %s117 = ssub.s32 %s24, %s36
      %s118 = ssub.s32 %s25, %s32
      %s119 = sor.u32 %s117, %s118
      %p120 = scmp.eq.s32.totalorder %s119, 0
      %s122 = sadd.s32 %s121, 1
      %s123 = scalar_select %p120, %s121, %s122
      %p126 = pneg %p120
      %p127 = scmp.eq.s32.totalorder %s17, 1
      %p128 = por %p126, %p127
      %p129 = scmp.ne.s32.totalorder %s121, %s124
      %p130 = scmp.eq.s32.totalorder %s17, 0
      %p131 = por %p129, %p130
      %p132 = scmp.ne.s32.totalorder %s121, %s124
      %p133 = scmp.eq.s32.totalorder %s22, 1
      %p134 = por %p132, %p133
      %p135 = scmp.ne.s32.totalorder %s124, %s125
      %p136 = scmp.eq.s32.totalorder %s22, 0
      %p137 = por %p135, %p136
      %p138 = scmp.ne.s32.totalorder %s124, %s125
      %p139 = scmp.eq.s32.totalorder %s23, 1
      %p140 = por %p138, %p139
      %p142 = scmp.ne.s32.totalorder %s125, %s141
      %p143 = scmp.eq.s32.totalorder %s23, 0
      %p144 = por %p142, %p143
      %s145 = ssub.s32 %s24, %s36
      %s146 = ssub.s32 %s25, %s32
      %s147 = sor.u32 %s145, %s146
      %p148 = scmp.eq.s32.totalorder %s147, 0
      %s150 = sadd.s32 %s149, 1
      %s151 = scalar_select %p148, %s149, %s150
      %p154 = pneg %p148
      %p155 = scmp.eq.s32.totalorder %s17, 1
      %p156 = por %p154, %p155
      %p157 = scmp.ne.s32.totalorder %s149, %s152
      %p158 = scmp.eq.s32.totalorder %s17, 0
      %p159 = por %p157, %p158
      %p160 = scmp.ne.s32.totalorder %s149, %s152
      %p161 = scmp.eq.s32.totalorder %s22, 1
      %p162 = por %p160, %p161
      %p163 = scmp.ne.s32.totalorder %s152, %s153
      %p164 = scmp.eq.s32.totalorder %s22, 0
      %p165 = por %p163, %p164
      %p166 = scmp.ne.s32.totalorder %s152, %s153
      %p167 = scmp.eq.s32.totalorder %s23, 1
      %p168 = por %p166, %p167
      %p170 = scmp.ne.s32.totalorder %s153, %s169
      %p171 = scmp.eq.s32.totalorder %s23, 0
      %p172 = por %p170, %p171
      %p173 = scmp.le.s32.totalorder 1, %s17
      %p174 = scmp.lt.s32.totalorder %s17, 3
      %p175 = pnand %p173, %p174
      %p176 = pneg %p175
      // Predicated region
      $region9: #{tpu_custom_call.1} parent=5 // pred_check
        _
      $region10: #{tpu_custom_call.1} parent=5 // pred_check_branch
        %178 = sbr.rel (%p175) target = $region12
      $region11: #{tpu_custom_call.1} parent=5 // pred_region
        %s179 = ssub.s32 %s17, 1
        // Predicated region
        $region13: #{tpu_custom_call.1} parent=11 // pred_check
          %p180 = pneg %p83
        $region14: #{tpu_custom_call.1} parent=11 // pred_check_branch
          %182 = sbr.rel (%p180) target = $region16
        $region15: #{tpu_custom_call.1} parent=11 // pred_region
          %p183 = scmp.lt.s32.totalorder %s27, 0
          %s184 = scalar_select %p183, %s27, 0
          %s185 = smul.addr %s184, 8
          %s186 = scalar_lea.vmem %s1, %s185
        $region16: #{tpu_custom_call.1} parent=11 // pred_fallthru
          _
        // Predicated region
        $region17: #{tpu_custom_call.1} parent=11 // pred_check
          %p187 = pneg %p109
        $region18: #{tpu_custom_call.1} parent=11 // pred_check_branch
          %189 = sbr.rel (%p187) target = $region20
        $region19: #{tpu_custom_call.1} parent=11 // pred_region
          %p190 = scmp.lt.s32.totalorder %s27, 0
          %s191 = scalar_select %p190, %s27, 0
          %s192 = scalar_lea.vmem %s2, %s191
        $region20: #{tpu_custom_call.1} parent=11 // pred_fallthru
          _
      $region12: #{tpu_custom_call.1} parent=5 // pred_fallthru
        _
      %p193 = scmp.lt.s32.totalorder %s17, 2
      // Predicated region
      $region21: #{tpu_custom_call.1} parent=5 // pred_check
        %p194 = pneg %p193
      $region22: #{tpu_custom_call.1} parent=5 // pred_check_branch
        %196 = sbr.rel (%p194) target = $region24
      $region23: #{tpu_custom_call.1} parent=5 // pred_region
        // Predicated region
        $region25: #{tpu_custom_call.1} parent=23 // pred_check
          %p197 = pneg %p51
        $region26: #{tpu_custom_call.1} parent=23 // pred_check_branch
          %199 = sbr.rel (%p197) target = $region28
        $region27: #{tpu_custom_call.1} parent=23 // pred_region
          %s200 = smul.u32 2, %s24
          %s201 = ssub.s32 3, %s200
          %p202 = scmp.lt.s32.totalorder %s201, 2
          %s203 = scalar_select %p202, %s201, 2
          %s204 = smul.u32 128, %s203
          %s205 = smul.u32 %s204, 10
          %s206 = smul.u32 %s205, 2
          %p207 = scmp.lt.s32.totalorder %s200, 2
          %s208 = scalar_select %p207, %s200, 2
          %p209 = scmp.lt.s32.totalorder %s25, 0
          %s210 = scalar_select %p209, %s25, 0
          %s211 = smul.addr %s208, 20
          %s212 = sadd.s32 %s210, %s211
          %s213 = smul.addr %s212, 8
          %s214 = scalar_lea.vmem %s0, %s213
          %s215 = smul.u32 2, %s24
          %s216 = ssub.s32 3, %s215
          %p217 = scmp.lt.s32.totalorder %s216, 2
          %s218 = scalar_select %p217, %s216, 2
          %s219 = smul.u32 128, %s218
          %s220 = smul.u32 %s219, 10
          %s221 = smul.u32 %s220, 2
        $region28: #{tpu_custom_call.1} parent=23 // pred_fallthru
          _
      $region24: #{tpu_custom_call.1} parent=5 // pred_fallthru
        _
      %p222 = scmp.le.s32.totalorder 1, %s17
      %p223 = scmp.lt.s32.totalorder %s17, 3
      %p224 = pnand %p222, %p223
      %p225 = pneg %p224
      // Predicated region
      $region29: #{tpu_custom_call.1} parent=5 // pred_check
        _
      $region30: #{tpu_custom_call.1} parent=5 // pred_check_branch
        %227 = sbr.rel (%p224) target = $region32
      $region31: #{tpu_custom_call.1} parent=5 // pred_region
        %s228 = ssub.s32 %s17, 1
        %s229 = smul.u32 2, %s26
        %s230 = ssub.s32 3, %s229
        %p231 = scmp.lt.s32.totalorder %s230, 2
        %s232 = scalar_select %p231, %s230, 2
        %s233 = smul.u32 128, %s232
        %s234 = smul.u32 %s233, 10
        %s235 = smul.u32 %s234, 2
        %p236 = scmp.lt.s32.totalorder %s229, 2
        %s237 = scalar_select %p236, %s229, 2
        %p238 = scmp.lt.s32.totalorder %s27, 0
        %s239 = scalar_select %p238, %s27, 0
        %s240 = smul.addr %s237, 20
        %s241 = sadd.s32 %s239, %s240
        %s242 = smul.addr %s241, 8
        %s243 = scalar_lea.vmem %s0, %s242
        %p244 = pneg %p57
        %p245 = pneg %p54
        %p246 = scmp.lt.s32.totalorder %s27, 0
        %s247 = scalar_select %p246, %s27, 0
        %s248 = smul.addr %s247, 8
        %s249 = scalar_lea.vmem %s1, %s248
        %p250 = pneg %p83
        %p251 = pneg %p80
        %p252 = scmp.lt.s32.totalorder %s27, 0
        %s253 = scalar_select %p252, %s27, 0
        %s254 = scalar_lea.vmem %s2, %s253
        %p255 = pneg %p109
        %p256 = pneg %p106
        %p257 = pneg %p137
        %p258 = pneg %p134
        %s259 = sand.u32 %s124, 1
        %s260 = scalar_lea.sflag [#allocation4], %s259
        %s261 = sand.u32 %s124, 1
        %s262 = smul.addr %s261, 64
        %s263 = scalar_lea.vmem [#allocation3], %s262
        %p264 = pneg %p165
        %p265 = pneg %p162
        %s266 = sand.u32 %s152, 1
        %s267 = scalar_lea.sflag [#allocation6], %s266
        %s268 = sand.u32 %s152, 1
        %s269 = smul.addr %s268, 2
        %s270 = scalar_lea.vmem [#allocation5], %s269
        %s271 = smul.u32 2, %s26
        %s272 = ssub.s32 3, %s271
        %p273 = scmp.lt.s32.totalorder %s272, 2
        %s274 = scalar_select %p273, %s272, 2
        %s275 = smul.u32 128, %s274
        %s276 = smul.u32 %s275, 10
        %s277 = smul.u32 %s276, 2
        %p278 = scmp.lt.s32.totalorder %s271, 2
        %s279 = scalar_select %p278, %s271, 2
        %p280 = scmp.lt.s32.totalorder %s27, 0
        %s281 = scalar_select %p280, %s27, 0
        %s282 = smul.addr %s279, 20
        %s283 = sadd.s32 %s281, %s282
        %s284 = smul.addr %s283, 8
        %s285 = scalar_lea.vmem %s0, %s284
        %s286 = smul.u32 2, %s26
        %s287 = ssub.s32 3, %s286
        %p288 = scmp.lt.s32.totalorder %s287, 2
        %s289 = scalar_select %p288, %s287, 2
        %s290 = smul.u32 128, %s289
        %s291 = smul.u32 %s290, 10
        %s292 = smul.u32 %s291, 2
        %p293 = scmp.lt.s32.totalorder %s27, 0
        %s294 = scalar_select %p293, %s27, 0
        %s295 = smul.addr %s294, 8
        %s296 = scalar_lea.vmem %s1, %s295
        %p297 = scmp.lt.s32.totalorder %s27, 0
        %s298 = scalar_select %p297, %s27, 0
        %s299 = scalar_lea.vmem %s2, %s298
        %s300 = smul.u32 2, %s26
        %s301 = ssub.s32 3, %s300
        %p302 = scmp.lt.s32.totalorder %s301, 2
        %s303 = scalar_select %p302, %s301, 2
        %s304 = smul.u32 64, %s303
        %s305 = smul.u32 %s304, 8
        %v306 = vld [vmem:[%s285] sm:$0xff]
        %v307 = vld [vmem:[%s285 + $0x8] sm:$0x3]
        %v308 = vld [vmem:[%s285 + $0x10] sm:$0xff]
        %v309 = vld [vmem:[%s285 + $0x18] sm:$0x3]
        %v310 = vld [vmem:[%s285 + $0x20] sm:$0xff]
        %v311 = vld [vmem:[%s285 + $0x28] sm:$0x3]
        %v312 = vld [vmem:[%s285 + $0x30] sm:$0xff]
        %v313 = vld [vmem:[%s285 + $0x38] sm:$0x3]
        %v314 = vld [vmem:[%s285 + $0x40] sm:$0xff]
        %v315 = vld [vmem:[%s285 + $0x48] sm:$0x3]
        %v316 = vld [vmem:[%s285 + $0x50] sm:$0xff]
        %v317 = vld [vmem:[%s285 + $0x58] sm:$0x3]
        %v318 = vld [vmem:[%s285 + $0x60] sm:$0xff]
        %v319 = vld [vmem:[%s285 + $0x68] sm:$0x3]
        %v320 = vld [vmem:[%s285 + $0x70] sm:$0xff]
        %v321 = vld [vmem:[%s285 + $0x78] sm:$0x3]
        %v322 = vld [vmem:[%s285 + $0x80] sm:$0xff]
        %v323 = vld [vmem:[%s285 + $0x88] sm:$0x3]
        %v324 = vld [vmem:[%s285 + $0x90] sm:$0xff]
        %v325 = vld [vmem:[%s285 + $0x98] sm:$0x3]
        %v326 = vld [vmem:[%s285 + $0xa0] sm:$0xff]
        %v327 = vld [vmem:[%s285 + $0xa8] sm:$0x3]
        %v328 = vld [vmem:[%s285 + $0xb0] sm:$0xff]
        %v329 = vld [vmem:[%s285 + $0xb8] sm:$0x3]
        %v330 = vld [vmem:[%s285 + $0xc0] sm:$0xff]
        %v331 = vld [vmem:[%s285 + $0xc8] sm:$0x3]
        %v332 = vld [vmem:[%s285 + $0xd0] sm:$0xff]
        %v333 = vld [vmem:[%s285 + $0xd8] sm:$0x3]
        %v334 = vld [vmem:[%s285 + $0xe0] sm:$0xff]
        %v335 = vld [vmem:[%s285 + $0xe8] sm:$0x3]
        %v336 = vld [vmem:[%s285 + $0xf0] sm:$0xff]
        %v337 = vld [vmem:[%s285 + $0xf8] sm:$0x3]
        %v338 = vld [vmem:[%s285 + $0x100] sm:$0xff]
        %v339 = vld [vmem:[%s285 + $0x108] sm:$0x3]
        %v340 = vld [vmem:[%s285 + $0x110] sm:$0xff]
        %v341 = vld [vmem:[%s285 + $0x118] sm:$0x3]
        %v342 = vld [vmem:[%s285 + $0x120] sm:$0xff]
        %v343 = vld [vmem:[%s285 + $0x128] sm:$0x3]
        %v344 = vld [vmem:[%s285 + $0x130] sm:$0xff]
        %v345 = vld [vmem:[%s285 + $0x138] sm:$0x3]
        %vm346 = vcmask 130048
        %347 = vst.msk [vmem:[#allocation2] sm:$0xff] %vm346, %v306
        %vm348 = vcmask 123904
        %349 = vst.msk [vmem:[#allocation2 + $0x8] sm:$0x3] %vm348, %v307
        %350 = vst.msk [vmem:[#allocation2 + $0x10] sm:$0xff] %vm346, %v308
        %351 = vst.msk [vmem:[#allocation2 + $0x18] sm:$0x3] %vm348, %v309
        %352 = vst.msk [vmem:[#allocation2 + $0x20] sm:$0xff] %vm346, %v310
        %353 = vst.msk [vmem:[#allocation2 + $0x28] sm:$0x3] %vm348, %v311
        %354 = vst.msk [vmem:[#allocation2 + $0x30] sm:$0xff] %vm346, %v312
        %355 = vst.msk [vmem:[#allocation2 + $0x38] sm:$0x3] %vm348, %v313
        %356 = vst.msk [vmem:[#allocation2 + $0x40] sm:$0xff] %vm346, %v314
        %357 = vst.msk [vmem:[#allocation2 + $0x48] sm:$0x3] %vm348, %v315
        %358 = vst.msk [vmem:[#allocation2 + $0x50] sm:$0xff] %vm346, %v316
        %359 = vst.msk [vmem:[#allocation2 + $0x58] sm:$0x3] %vm348, %v317
        %360 = vst.msk [vmem:[#allocation2 + $0x60] sm:$0xff] %vm346, %v318
        %361 = vst.msk [vmem:[#allocation2 + $0x68] sm:$0x3] %vm348, %v319
        %362 = vst.msk [vmem:[#allocation2 + $0x70] sm:$0xff] %vm346, %v320
        %363 = vst.msk [vmem:[#allocation2 + $0x78] sm:$0x3] %vm348, %v321
        %364 = vst.msk [vmem:[#allocation2 + $0x80] sm:$0xff] %vm346, %v322
        %365 = vst.msk [vmem:[#allocation2 + $0x88] sm:$0x3] %vm348, %v323
        %366 = vst.msk [vmem:[#allocation2 + $0x90] sm:$0xff] %vm346, %v324
        %367 = vst.msk [vmem:[#allocation2 + $0x98] sm:$0x3] %vm348, %v325
        %368 = vst.msk [vmem:[#allocation2 + $0xa0] sm:$0xff] %vm346, %v326
        %369 = vst.msk [vmem:[#allocation2 + $0xa8] sm:$0x3] %vm348, %v327
        %370 = vst.msk [vmem:[#allocation2 + $0xb0] sm:$0xff] %vm346, %v328
        %371 = vst.msk [vmem:[#allocation2 + $0xb8] sm:$0x3] %vm348, %v329
        %372 = vst.msk [vmem:[#allocation2 + $0xc0] sm:$0xff] %vm346, %v330
        %373 = vst.msk [vmem:[#allocation2 + $0xc8] sm:$0x3] %vm348, %v331
        %374 = vst.msk [vmem:[#allocation2 + $0xd0] sm:$0xff] %vm346, %v332
        %375 = vst.msk [vmem:[#allocation2 + $0xd8] sm:$0x3] %vm348, %v333
        %376 = vst.msk [vmem:[#allocation2 + $0xe0] sm:$0xff] %vm346, %v334
        %377 = vst.msk [vmem:[#allocation2 + $0xe8] sm:$0x3] %vm348, %v335
        %378 = vst.msk [vmem:[#allocation2 + $0xf0] sm:$0xff] %vm346, %v336
        %379 = vst.msk [vmem:[#allocation2 + $0xf8] sm:$0x3] %vm348, %v337
        %380 = vst.msk [vmem:[#allocation2 + $0x100] sm:$0xff] %vm346, %v338
        %381 = vst.msk [vmem:[#allocation2 + $0x108] sm:$0x3] %vm348, %v339
        %382 = vst.msk [vmem:[#allocation2 + $0x110] sm:$0xff] %vm346, %v340
        %383 = vst.msk [vmem:[#allocation2 + $0x118] sm:$0x3] %vm348, %v341
        %384 = vst.msk [vmem:[#allocation2 + $0x120] sm:$0xff] %vm346, %v342
        %385 = vst.msk [vmem:[#allocation2 + $0x128] sm:$0x3] %vm348, %v343
        %386 = vst.msk [vmem:[#allocation2 + $0x130] sm:$0xff] %vm346, %v344
        %387 = vst.msk [vmem:[#allocation2 + $0x138] sm:$0x3] %vm348, %v345
        %v388 = vld [vmem:[#allocation2] sm:$0xff]
        %v389 = vld [vmem:[#allocation2 + $0x8] sm:$0xff]
        %v390 = vld [vmem:[#allocation2 + $0x10] sm:$0xff]
        %v391 = vld [vmem:[#allocation2 + $0x18] sm:$0xff]
        %v392 = vld [vmem:[#allocation2 + $0x20] sm:$0xff]
        %v393 = vld [vmem:[#allocation2 + $0x28] sm:$0xff]
        %v394 = vld [vmem:[#allocation2 + $0x30] sm:$0xff]
        %v395 = vld [vmem:[#allocation2 + $0x38] sm:$0xff]
        %v396 = vld [vmem:[#allocation2 + $0x40] sm:$0xff]
        %v397 = vld [vmem:[#allocation2 + $0x48] sm:$0xff]
        %v398 = vld [vmem:[#allocation2 + $0x50] sm:$0xff]
        %v399 = vld [vmem:[#allocation2 + $0x58] sm:$0xff]
        %v400 = vld [vmem:[#allocation2 + $0x60] sm:$0xff]
        %v401 = vld [vmem:[#allocation2 + $0x68] sm:$0xff]
        %v402 = vld [vmem:[#allocation2 + $0x70] sm:$0xff]
        %v403 = vld [vmem:[#allocation2 + $0x78] sm:$0xff]
        %v404 = vld [vmem:[#allocation2 + $0x80] sm:$0xff]
        %v405 = vld [vmem:[#allocation2 + $0x88] sm:$0xff]
        %v406 = vld [vmem:[#allocation2 + $0x90] sm:$0xff]
        %v407 = vld [vmem:[#allocation2 + $0x98] sm:$0xff]
        %v408 = vld [vmem:[#allocation2 + $0xa0] sm:$0xff]
        %v409 = vld [vmem:[#allocation2 + $0xa8] sm:$0xff]
        %v410 = vld [vmem:[#allocation2 + $0xb0] sm:$0xff]
        %v411 = vld [vmem:[#allocation2 + $0xb8] sm:$0xff]
        %v412 = vld [vmem:[#allocation2 + $0xc0] sm:$0xff]
        %v413 = vld [vmem:[#allocation2 + $0xc8] sm:$0xff]
        %v414 = vld [vmem:[#allocation2 + $0xd0] sm:$0xff]
        %v415 = vld [vmem:[#allocation2 + $0xd8] sm:$0xff]
        %v416 = vld [vmem:[#allocation2 + $0xe0] sm:$0xff]
        %v417 = vld [vmem:[#allocation2 + $0xe8] sm:$0xff]
        %v418 = vld [vmem:[#allocation2 + $0xf0] sm:$0xff]
        %v419 = vld [vmem:[#allocation2 + $0xf8] sm:$0xff]
        %v420 = vld [vmem:[#allocation2 + $0x100] sm:$0xff]
        %v421 = vld [vmem:[#allocation2 + $0x108] sm:$0xff]
        %v422 = vld [vmem:[#allocation2 + $0x110] sm:$0xff]
        %v423 = vld [vmem:[#allocation2 + $0x118] sm:$0xff]
        %v424 = vld [vmem:[#allocation2 + $0x120] sm:$0xff]
        %v425 = vld [vmem:[#allocation2 + $0x128] sm:$0xff]
        %v426 = vld [vmem:[#allocation2 + $0x130] sm:$0xff]
        %v427 = vld [vmem:[#allocation2 + $0x138] sm:$0xff]
        %v428 = vld [vmem:[%s296] sm:$0xff]
        %v429 = vld [vmem:[%s296 + $0x8] sm:$0x1]
        %v430 = vrot.slane %v388, 1
        %v431 = vrot.slane %v390, 1
        %v432 = vrot.slane %v392, 1
        %v433 = vrot.slane %v394, 1
        %v434 = vrot.slane %v396, 1
        %v435 = vrot.slane %v398, 1
        %v436 = vrot.slane %v400, 1
        %v437 = vrot.slane %v402, 1
        %v438 = vrot.slane %v404, 1
        %v439 = vrot.slane %v406, 1
        %v440 = vrot.slane %v408, 1
        %v441 = vrot.slane %v410, 1
        %v442 = vrot.slane %v412, 1
        %v443 = vrot.slane %v414, 1
        %v444 = vrot.slane %v416, 1
        %v445 = vrot.slane %v418, 1
        %v446 = vrot.slane %v420, 1
        %v447 = vrot.slane %v422, 1
        %v448 = vrot.slane %v424, 1
        %v449 = vrot.slane %v426, 1
        %v450 = vrot.slane %v389, 1
        %v451 = vrot.slane %v391, 1
        %v452 = vrot.slane %v393, 1
        %v453 = vrot.slane %v395, 1
        %v454 = vrot.slane %v397, 1
        %v455 = vrot.slane %v399, 1
        %v456 = vrot.slane %v401, 1
        %v457 = vrot.slane %v403, 1
        %v458 = vrot.slane %v405, 1
        %v459 = vrot.slane %v407, 1
        %v460 = vrot.slane %v409, 1
        %v461 = vrot.slane %v411, 1
        %v462 = vrot.slane %v413, 1
        %v463 = vrot.slane %v415, 1
        %v464 = vrot.slane %v417, 1
        %v465 = vrot.slane %v419, 1
        %v466 = vrot.slane %v421, 1
        %v467 = vrot.slane %v423, 1
        %v468 = vrot.slane %v425, 1
        %v469 = vrot.slane %v427, 1
        %v470 = vlaneseq
        %v471 = vshrl.u32 %v470, 7
        %vm472 = vcmp.lt.s32.totalorder %v471, 7
        %v473 = vsel %vm472, %v430, %v450
        %v474 = vsel %vm472, %v431, %v451
        %v475 = vsel %vm472, %v432, %v452
        %v476 = vsel %vm472, %v433, %v453
        %v477 = vsel %vm472, %v434, %v454
        %v478 = vsel %vm472, %v435, %v455
        %v479 = vsel %vm472, %v436, %v456
        %v480 = vsel %vm472, %v437, %v457
        %v481 = vsel %vm472, %v438, %v458
        %v482 = vsel %vm472, %v439, %v459
        %v483 = vsel %vm472, %v440, %v460
        %v484 = vsel %vm472, %v441, %v461
        %v485 = vsel %vm472, %v442, %v462
        %v486 = vsel %vm472, %v443, %v463
        %v487 = vsel %vm472, %v444, %v464
        %v488 = vsel %vm472, %v445, %v465
        %v489 = vsel %vm472, %v446, %v466
        %v490 = vsel %vm472, %v447, %v467
        %v491 = vsel %vm472, %v448, %v468
        %v492 = vsel %vm472, %v449, %v469
        %v493 = vsel %vm472, %v450, %v430
        %v494 = vsel %vm472, %v451, %v431
        %v495 = vsel %vm472, %v452, %v432
        %v496 = vsel %vm472, %v453, %v433
        %v497 = vsel %vm472, %v454, %v434
        %v498 = vsel %vm472, %v455, %v435
        %v499 = vsel %vm472, %v456, %v436
        %v500 = vsel %vm472, %v457, %v437
        %v501 = vsel %vm472, %v458, %v438
        %v502 = vsel %vm472, %v459, %v439
        %v503 = vsel %vm472, %v460, %v440
        %v504 = vsel %vm472, %v461, %v441
        %v505 = vsel %vm472, %v462, %v442
        %v506 = vsel %vm472, %v463, %v443
        %v507 = vsel %vm472, %v464, %v444
        %v508 = vsel %vm472, %v465, %v445
        %v509 = vsel %vm472, %v466, %v446
        %v510 = vsel %vm472, %v467, %v447
        %v511 = vsel %vm472, %v468, %v448
        %v512 = vsel %vm472, %v469, %v449
        %v513 = vrot.slane %v388, 2
        %v514 = vrot.slane %v390, 2
        %v515 = vrot.slane %v392, 2
        %v516 = vrot.slane %v394, 2
        %v517 = vrot.slane %v396, 2
        %v518 = vrot.slane %v398, 2
        %v519 = vrot.slane %v400, 2
        %v520 = vrot.slane %v402, 2
        %v521 = vrot.slane %v404, 2
        %v522 = vrot.slane %v406, 2
        %v523 = vrot.slane %v408, 2
        %v524 = vrot.slane %v410, 2
        %v525 = vrot.slane %v412, 2
        %v526 = vrot.slane %v414, 2
        %v527 = vrot.slane %v416, 2
        %v528 = vrot.slane %v418, 2
        %v529 = vrot.slane %v420, 2
        %v530 = vrot.slane %v422, 2
        %v531 = vrot.slane %v424, 2
        %v532 = vrot.slane %v426, 2
        %v533 = vrot.slane %v389, 2
        %v534 = vrot.slane %v391, 2
        %v535 = vrot.slane %v393, 2
        %v536 = vrot.slane %v395, 2
        %v537 = vrot.slane %v397, 2
        %v538 = vrot.slane %v399, 2
        %v539 = vrot.slane %v401, 2
        %v540 = vrot.slane %v403, 2
        %v541 = vrot.slane %v405, 2
        %v542 = vrot.slane %v407, 2
        %v543 = vrot.slane %v409, 2
        %v544 = vrot.slane %v411, 2
        %v545 = vrot.slane %v413, 2
        %v546 = vrot.slane %v415, 2
        %v547 = vrot.slane %v417, 2
        %v548 = vrot.slane %v419, 2
        %v549 = vrot.slane %v421, 2
        %v550 = vrot.slane %v423, 2
        %v551 = vrot.slane %v425, 2
        %v552 = vrot.slane %v427, 2
        %vm553 = vcmp.lt.s32.totalorder %v471, 6
        %v554 = vsel %vm553, %v513, %v533
        %v555 = vsel %vm553, %v514, %v534
        %v556 = vsel %vm553, %v515, %v535
        %v557 = vsel %vm553, %v516, %v536
        %v558 = vsel %vm553, %v517, %v537
        %v559 = vsel %vm553, %v518, %v538
        %v560 = vsel %vm553, %v519, %v539
        %v561 = vsel %vm553, %v520, %v540
        %v562 = vsel %vm553, %v521, %v541
        %v563 = vsel %vm553, %v522, %v542
        %v564 = vsel %vm553, %v523, %v543
        %v565 = vsel %vm553, %v524, %v544
        %v566 = vsel %vm553, %v525, %v545
        %v567 = vsel %vm553, %v526, %v546
        %v568 = vsel %vm553, %v527, %v547
        %v569 = vsel %vm553, %v528, %v548
        %v570 = vsel %vm553, %v529, %v549
        %v571 = vsel %vm553, %v530, %v550
        %v572 = vsel %vm553, %v531, %v551
        %v573 = vsel %vm553, %v532, %v552
        %v574 = vsel %vm553, %v533, %v513
        %v575 = vsel %vm553, %v534, %v514
        %v576 = vsel %vm553, %v535, %v515
        %v577 = vsel %vm553, %v536, %v516
        %v578 = vsel %vm553, %v537, %v517
        %v579 = vsel %vm553, %v538, %v518
        %v580 = vsel %vm553, %v539, %v519
        %v581 = vsel %vm553, %v540, %v520
        %v582 = vsel %vm553, %v541, %v521
        %v583 = vsel %vm553, %v542, %v522
        %v584 = vsel %vm553, %v543, %v523
        %v585 = vsel %vm553, %v544, %v524
        %v586 = vsel %vm553, %v545, %v525
        %v587 = vsel %vm553, %v546, %v526
        %v588 = vsel %vm553, %v547, %v527
        %v589 = vsel %vm553, %v548, %v528
        %v590 = vsel %vm553, %v549, %v529
        %v591 = vsel %vm553, %v550, %v530
        %v592 = vsel %vm553, %v551, %v531
        %v593 = vsel %vm553, %v552, %v532
        %v594 = vlaneseq
        %v595 = vshrl.u32 %v594, 7
        %v596 = vsub.s32 0, %v595
        %v597 = vrot.slane %v428, %v596
        %v598 = vmul.f32 %v388, %v597
        %v599 = vmul.f32 %v389, %v597
        %v600 = vmul.f32 %v390, %v597
        %v601 = vmul.f32 %v391, %v597
        %v602 = vmul.f32 %v392, %v597
        %v603 = vmul.f32 %v393, %v597
        %v604 = vmul.f32 %v394, %v597
        %v605 = vmul.f32 %v395, %v597
        %v606 = vmul.f32 %v396, %v597
        %v607 = vmul.f32 %v397, %v597
        %v608 = vmul.f32 %v398, %v597
        %v609 = vmul.f32 %v399, %v597
        %v610 = vmul.f32 %v400, %v597
        %v611 = vmul.f32 %v401, %v597
        %v612 = vmul.f32 %v402, %v597
        %v613 = vmul.f32 %v403, %v597
        %v614 = vmul.f32 %v408, %v597
        %v615 = vmul.f32 %v409, %v597
        %v616 = vmul.f32 %v410, %v597
        %v617 = vmul.f32 %v411, %v597
        %v618 = vmul.f32 %v412, %v597
        %v619 = vmul.f32 %v413, %v597
        %v620 = vmul.f32 %v414, %v597
        %v621 = vmul.f32 %v415, %v597
        %v622 = vmul.f32 %v416, %v597
        %v623 = vmul.f32 %v417, %v597
        %v624 = vmul.f32 %v418, %v597
        %v625 = vmul.f32 %v419, %v597
        %v626 = vmul.f32 %v420, %v597
        %v627 = vmul.f32 %v421, %v597
        %v628 = vmul.f32 %v422, %v597
        %v629 = vmul.f32 %v423, %v597
        %v630 = vlaneseq
        %v631 = vshrl.u32 %v630, 7
        %v632 = vsub.s32 1, %v631
        %v633 = vrot.slane %v428, %v632
        %v634 = vmul.f32 %v473, %v633
        %v635 = vmul.f32 %v493, %v633
        %v636 = vmul.f32 %v474, %v633
        %v637 = vmul.f32 %v494, %v633
        %v638 = vmul.f32 %v475, %v633
        %v639 = vmul.f32 %v495, %v633
        %v640 = vmul.f32 %v476, %v633
        %v641 = vmul.f32 %v496, %v633
        %v642 = vmul.f32 %v477, %v633
        %v643 = vmul.f32 %v497, %v633
        %v644 = vmul.f32 %v478, %v633
        %v645 = vmul.f32 %v498, %v633
        %v646 = vmul.f32 %v479, %v633
        %v647 = vmul.f32 %v499, %v633
        %v648 = vmul.f32 %v480, %v633
        %v649 = vmul.f32 %v500, %v633
        %v650 = vmul.f32 %v483, %v633
        %v651 = vmul.f32 %v503, %v633
        %v652 = vmul.f32 %v484, %v633
        %v653 = vmul.f32 %v504, %v633
        %v654 = vmul.f32 %v485, %v633
        %v655 = vmul.f32 %v505, %v633
        %v656 = vmul.f32 %v486, %v633
        %v657 = vmul.f32 %v506, %v633
        %v658 = vmul.f32 %v487, %v633
        %v659 = vmul.f32 %v507, %v633
        %v660 = vmul.f32 %v488, %v633
        %v661 = vmul.f32 %v508, %v633
        %v662 = vmul.f32 %v489, %v633
        %v663 = vmul.f32 %v509, %v633
        %v664 = vmul.f32 %v490, %v633
        %v665 = vmul.f32 %v510, %v633
        %v666 = vadd.f32 %v598, %v634
        %v667 = vadd.f32 %v599, %v635
        %v668 = vadd.f32 %v600, %v636
        %v669 = vadd.f32 %v601, %v637
        %v670 = vadd.f32 %v602, %v638
        %v671 = vadd.f32 %v603, %v639
        %v672 = vadd.f32 %v604, %v640
        %v673 = vadd.f32 %v605, %v641
        %v674 = vadd.f32 %v606, %v642
        %v675 = vadd.f32 %v607, %v643
        %v676 = vadd.f32 %v608, %v644
        %v677 = vadd.f32 %v609, %v645
        %v678 = vadd.f32 %v610, %v646
        %v679 = vadd.f32 %v611, %v647
        %v680 = vadd.f32 %v612, %v648
        %v681 = vadd.f32 %v613, %v649
        %v682 = vadd.f32 %v614, %v650
        %v683 = vadd.f32 %v615, %v651
        %v684 = vadd.f32 %v616, %v652
        %v685 = vadd.f32 %v617, %v653
        %v686 = vadd.f32 %v618, %v654
        %v687 = vadd.f32 %v619, %v655
        %v688 = vadd.f32 %v620, %v656
        %v689 = vadd.f32 %v621, %v657
        %v690 = vadd.f32 %v622, %v658
        %v691 = vadd.f32 %v623, %v659
        %v692 = vadd.f32 %v624, %v660
        %v693 = vadd.f32 %v625, %v661
        %v694 = vadd.f32 %v626, %v662
        %v695 = vadd.f32 %v627, %v663
        %v696 = vadd.f32 %v628, %v664
        %v697 = vadd.f32 %v629, %v665
        %v698 = vlaneseq
        %v699 = vshrl.u32 %v698, 7
        %v700 = vsub.s32 2, %v699
        %v701 = vrot.slane %v428, %v700
        %v702 = vmul.f32 %v554, %v701
        %v703 = vmul.f32 %v574, %v701
        %v704 = vmul.f32 %v555, %v701
        %v705 = vmul.f32 %v575, %v701
        %v706 = vmul.f32 %v556, %v701
        %v707 = vmul.f32 %v576, %v701
        %v708 = vmul.f32 %v557, %v701
        %v709 = vmul.f32 %v577, %v701
        %v710 = vmul.f32 %v558, %v701
        %v711 = vmul.f32 %v578, %v701
        %v712 = vmul.f32 %v559, %v701
        %v713 = vmul.f32 %v579, %v701
        %v714 = vmul.f32 %v560, %v701
        %v715 = vmul.f32 %v580, %v701
        %v716 = vmul.f32 %v561, %v701
        %v717 = vmul.f32 %v581, %v701
        %v718 = vmul.f32 %v564, %v701
        %v719 = vmul.f32 %v584, %v701
        %v720 = vmul.f32 %v565, %v701
        %v721 = vmul.f32 %v585, %v701
        %v722 = vmul.f32 %v566, %v701
        %v723 = vmul.f32 %v586, %v701
        %v724 = vmul.f32 %v567, %v701
        %v725 = vmul.f32 %v587, %v701
        %v726 = vmul.f32 %v568, %v701
        %v727 = vmul.f32 %v588, %v701
        %v728 = vmul.f32 %v569, %v701
        %v729 = vmul.f32 %v589, %v701
        %v730 = vmul.f32 %v570, %v701
        %v731 = vmul.f32 %v590, %v701
        %v732 = vmul.f32 %v571, %v701
        %v733 = vmul.f32 %v591, %v701
        %v734 = vadd.f32 %v666, %v702
        %v735 = vadd.f32 %v667, %v703
        %v736 = vadd.f32 %v668, %v704
        %v737 = vadd.f32 %v669, %v705
        %v738 = vadd.f32 %v670, %v706
        %v739 = vadd.f32 %v671, %v707
        %v740 = vadd.f32 %v672, %v708
        %v741 = vadd.f32 %v673, %v709
        %v742 = vadd.f32 %v674, %v710
        %v743 = vadd.f32 %v675, %v711
        %v744 = vadd.f32 %v676, %v712
        %v745 = vadd.f32 %v677, %v713
        %v746 = vadd.f32 %v678, %v714
        %v747 = vadd.f32 %v679, %v715
        %v748 = vadd.f32 %v680, %v716
        %v749 = vadd.f32 %v681, %v717
        %v750 = vadd.f32 %v682, %v718
        %v751 = vadd.f32 %v683, %v719
        %v752 = vadd.f32 %v684, %v720
        %v753 = vadd.f32 %v685, %v721
        %v754 = vadd.f32 %v686, %v722
        %v755 = vadd.f32 %v687, %v723
        %v756 = vadd.f32 %v688, %v724
        %v757 = vadd.f32 %v689, %v725
        %v758 = vadd.f32 %v690, %v726
        %v759 = vadd.f32 %v691, %v727
        %v760 = vadd.f32 %v692, %v728
        %v761 = vadd.f32 %v693, %v729
        %v762 = vadd.f32 %v694, %v730
        %v763 = vadd.f32 %v695, %v731
        %v764 = vadd.f32 %v696, %v732
        %v765 = vadd.f32 %v697, %v733
        %v766 = vlaneseq
        %v767 = vshrl.u32 %v766, 7
        %v768 = vsub.s32 3, %v767
        %v769 = vrot.slane %v428, %v768
        %v770 = vmul.f32 %v390, %v769
        %v771 = vmul.f32 %v391, %v769
        %v772 = vmul.f32 %v392, %v769
        %v773 = vmul.f32 %v393, %v769
        %v774 = vmul.f32 %v394, %v769
        %v775 = vmul.f32 %v395, %v769
        %v776 = vmul.f32 %v396, %v769
        %v777 = vmul.f32 %v397, %v769
        %v778 = vmul.f32 %v398, %v769
        %v779 = vmul.f32 %v399, %v769
        %v780 = vmul.f32 %v400, %v769
        %v781 = vmul.f32 %v401, %v769
        %v782 = vmul.f32 %v402, %v769
        %v783 = vmul.f32 %v403, %v769
        %v784 = vmul.f32 %v404, %v769
        %v785 = vmul.f32 %v405, %v769
        %v786 = vmul.f32 %v410, %v769
        %v787 = vmul.f32 %v411, %v769
        %v788 = vmul.f32 %v412, %v769
        %v789 = vmul.f32 %v413, %v769
        %v790 = vmul.f32 %v414, %v769
        %v791 = vmul.f32 %v415, %v769
        %v792 = vmul.f32 %v416, %v769
        %v793 = vmul.f32 %v417, %v769
        %v794 = vmul.f32 %v418, %v769
        %v795 = vmul.f32 %v419, %v769
        %v796 = vmul.f32 %v420, %v769
        %v797 = vmul.f32 %v421, %v769
        %v798 = vmul.f32 %v422, %v769
        %v799 = vmul.f32 %v423, %v769
        %v800 = vmul.f32 %v424, %v769
        %v801 = vmul.f32 %v425, %v769
        %v802 = vadd.f32 %v734, %v770
        %v803 = vadd.f32 %v735, %v771
        %v804 = vadd.f32 %v736, %v772
        %v805 = vadd.f32 %v737, %v773
        %v806 = vadd.f32 %v738, %v774
        %v807 = vadd.f32 %v739, %v775
        %v808 = vadd.f32 %v740, %v776
        %v809 = vadd.f32 %v741, %v777
        %v810 = vadd.f32 %v742, %v778
        %v811 = vadd.f32 %v743, %v779
        %v812 = vadd.f32 %v744, %v780
        %v813 = vadd.f32 %v745, %v781
        %v814 = vadd.f32 %v746, %v782
        %v815 = vadd.f32 %v747, %v783
        %v816 = vadd.f32 %v748, %v784
        %v817 = vadd.f32 %v749, %v785
        %v818 = vadd.f32 %v750, %v786
        %v819 = vadd.f32 %v751, %v787
        %v820 = vadd.f32 %v752, %v788
        %v821 = vadd.f32 %v753, %v789
        %v822 = vadd.f32 %v754, %v790
        %v823 = vadd.f32 %v755, %v791
        %v824 = vadd.f32 %v756, %v792
        %v825 = vadd.f32 %v757, %v793
        %v826 = vadd.f32 %v758, %v794
        %v827 = vadd.f32 %v759, %v795
        %v828 = vadd.f32 %v760, %v796
        %v829 = vadd.f32 %v761, %v797
        %v830 = vadd.f32 %v762, %v798
        %v831 = vadd.f32 %v763, %v799
        %v832 = vadd.f32 %v764, %v800
        %v833 = vadd.f32 %v765, %v801
        %v834 = vlaneseq
        %v835 = vshrl.u32 %v834, 7
        %v836 = vsub.s32 4, %v835
        %v837 = vrot.slane %v428, %v836
        %v838 = vmul.f32 %v474, %v837
        %v839 = vmul.f32 %v494, %v837
        %v840 = vmul.f32 %v475, %v837
        %v841 = vmul.f32 %v495, %v837
        %v842 = vmul.f32 %v476, %v837
        %v843 = vmul.f32 %v496, %v837
        %v844 = vmul.f32 %v477, %v837
        %v845 = vmul.f32 %v497, %v837
        %v846 = vmul.f32 %v478, %v837
        %v847 = vmul.f32 %v498, %v837
        %v848 = vmul.f32 %v479, %v837
        %v849 = vmul.f32 %v499, %v837
        %v850 = vmul.f32 %v480, %v837
        %v851 = vmul.f32 %v500, %v837
        %v852 = vmul.f32 %v481, %v837
        %v853 = vmul.f32 %v501, %v837
        %v854 = vmul.f32 %v484, %v837
        %v855 = vmul.f32 %v504, %v837
        %v856 = vmul.f32 %v485, %v837
        %v857 = vmul.f32 %v505, %v837
        %v858 = vmul.f32 %v486, %v837
        %v859 = vmul.f32 %v506, %v837
        %v860 = vmul.f32 %v487, %v837
        %v861 = vmul.f32 %v507, %v837
        %v862 = vmul.f32 %v488, %v837
        %v863 = vmul.f32 %v508, %v837
        %v864 = vmul.f32 %v489, %v837
        %v865 = vmul.f32 %v509, %v837
        %v866 = vmul.f32 %v490, %v837
        %v867 = vmul.f32 %v510, %v837
        %v868 = vmul.f32 %v491, %v837
        %v869 = vmul.f32 %v511, %v837
        %v870 = vadd.f32 %v802, %v838
        %v871 = vadd.f32 %v803, %v839
        %v872 = vadd.f32 %v804, %v840
        %v873 = vadd.f32 %v805, %v841
        %v874 = vadd.f32 %v806, %v842
        %v875 = vadd.f32 %v807, %v843
        %v876 = vadd.f32 %v808, %v844
        %v877 = vadd.f32 %v809, %v845
        %v878 = vadd.f32 %v810, %v846
        %v879 = vadd.f32 %v811, %v847
        %v880 = vadd.f32 %v812, %v848
        %v881 = vadd.f32 %v813, %v849
        %v882 = vadd.f32 %v814, %v850
        %v883 = vadd.f32 %v815, %v851
        %v884 = vadd.f32 %v816, %v852
        %v885 = vadd.f32 %v817, %v853
        %v886 = vadd.f32 %v818, %v854
        %v887 = vadd.f32 %v819, %v855
        %v888 = vadd.f32 %v820, %v856
        %v889 = vadd.f32 %v821, %v857
        %v890 = vadd.f32 %v822, %v858
        %v891 = vadd.f32 %v823, %v859
        %v892 = vadd.f32 %v824, %v860
        %v893 = vadd.f32 %v825, %v861
        %v894 = vadd.f32 %v826, %v862
        %v895 = vadd.f32 %v827, %v863
        %v896 = vadd.f32 %v828, %v864
        %v897 = vadd.f32 %v829, %v865
        %v898 = vadd.f32 %v830, %v866
        %v899 = vadd.f32 %v831, %v867
        %v900 = vadd.f32 %v832, %v868
        %v901 = vadd.f32 %v833, %v869
        %v902 = vlaneseq
        %v903 = vshrl.u32 %v902, 7
        %v904 = vsub.s32 5, %v903
        %v905 = vrot.slane %v428, %v904
        %v906 = vmul.f32 %v555, %v905
        %v907 = vmul.f32 %v575, %v905
        %v908 = vmul.f32 %v556, %v905
        %v909 = vmul.f32 %v576, %v905
        %v910 = vmul.f32 %v557, %v905
        %v911 = vmul.f32 %v577, %v905
        %v912 = vmul.f32 %v558, %v905
        %v913 = vmul.f32 %v578, %v905
        %v914 = vmul.f32 %v559, %v905
        %v915 = vmul.f32 %v579, %v905
        %v916 = vmul.f32 %v560, %v905
        %v917 = vmul.f32 %v580, %v905
        %v918 = vmul.f32 %v561, %v905
        %v919 = vmul.f32 %v581, %v905
        %v920 = vmul.f32 %v562, %v905
        %v921 = vmul.f32 %v582, %v905
        %v922 = vmul.f32 %v565, %v905
        %v923 = vmul.f32 %v585, %v905
        %v924 = vmul.f32 %v566, %v905
        %v925 = vmul.f32 %v586, %v905
        %v926 = vmul.f32 %v567, %v905
        %v927 = vmul.f32 %v587, %v905
        %v928 = vmul.f32 %v568, %v905
        %v929 = vmul.f32 %v588, %v905
        %v930 = vmul.f32 %v569, %v905
        %v931 = vmul.f32 %v589, %v905
        %v932 = vmul.f32 %v570, %v905
        %v933 = vmul.f32 %v590, %v905
        %v934 = vmul.f32 %v571, %v905
        %v935 = vmul.f32 %v591, %v905
        %v936 = vmul.f32 %v572, %v905
        %v937 = vmul.f32 %v592, %v905
        %v938 = vadd.f32 %v870, %v906
        %v939 = vadd.f32 %v871, %v907
        %v940 = vadd.f32 %v872, %v908
        %v941 = vadd.f32 %v873, %v909
        %v942 = vadd.f32 %v874, %v910
        %v943 = vadd.f32 %v875, %v911
        %v944 = vadd.f32 %v876, %v912
        %v945 = vadd.f32 %v877, %v913
        %v946 = vadd.f32 %v878, %v914
        %v947 = vadd.f32 %v879, %v915
        %v948 = vadd.f32 %v880, %v916
        %v949 = vadd.f32 %v881, %v917
        %v950 = vadd.f32 %v882, %v918
        %v951 = vadd.f32 %v883, %v919
        %v952 = vadd.f32 %v884, %v920
        %v953 = vadd.f32 %v885, %v921
        %v954 = vadd.f32 %v886, %v922
        %v955 = vadd.f32 %v887, %v923
        %v956 = vadd.f32 %v888, %v924
        %v957 = vadd.f32 %v889, %v925
        %v958 = vadd.f32 %v890, %v926
        %v959 = vadd.f32 %v891, %v927
        %v960 = vadd.f32 %v892, %v928
        %v961 = vadd.f32 %v893, %v929
        %v962 = vadd.f32 %v894, %v930
        %v963 = vadd.f32 %v895, %v931
        %v964 = vadd.f32 %v896, %v932
        %v965 = vadd.f32 %v897, %v933
        %v966 = vadd.f32 %v898, %v934
        %v967 = vadd.f32 %v899, %v935
        %v968 = vadd.f32 %v900, %v936
        %v969 = vadd.f32 %v901, %v937
        %v970 = vlaneseq
        %v971 = vshrl.u32 %v970, 7
        %v972 = vsub.s32 6, %v971
        %v973 = vrot.slane %v428, %v972
        %v974 = vmul.f32 %v392, %v973
        %v975 = vmul.f32 %v393, %v973
        %v976 = vmul.f32 %v394, %v973
        %v977 = vmul.f32 %v395, %v973
        %v978 = vmul.f32 %v396, %v973
        %v979 = vmul.f32 %v397, %v973
        %v980 = vmul.f32 %v398, %v973
        %v981 = vmul.f32 %v399, %v973
        %v982 = vmul.f32 %v400, %v973
        %v983 = vmul.f32 %v401, %v973
        %v984 = vmul.f32 %v402, %v973
        %v985 = vmul.f32 %v403, %v973
        %v986 = vmul.f32 %v404, %v973
        %v987 = vmul.f32 %v405, %v973
        %v988 = vmul.f32 %v406, %v973
        %v989 = vmul.f32 %v407, %v973
        %v990 = vmul.f32 %v412, %v973
        %v991 = vmul.f32 %v413, %v973
        %v992 = vmul.f32 %v414, %v973
        %v993 = vmul.f32 %v415, %v973
        %v994 = vmul.f32 %v416, %v973
        %v995 = vmul.f32 %v417, %v973
        %v996 = vmul.f32 %v418, %v973
        %v997 = vmul.f32 %v419, %v973
        %v998 = vmul.f32 %v420, %v973
        %v999 = vmul.f32 %v421, %v973
        %v1000 = vmul.f32 %v422, %v973
        %v1001 = vmul.f32 %v423, %v973
        %v1002 = vmul.f32 %v424, %v973
        %v1003 = vmul.f32 %v425, %v973
        %v1004 = vmul.f32 %v426, %v973
        %v1005 = vmul.f32 %v427, %v973
        %v1006 = vadd.f32 %v938, %v974
        %v1007 = vadd.f32 %v939, %v975
        %v1008 = vadd.f32 %v940, %v976
        %v1009 = vadd.f32 %v941, %v977
        %v1010 = vadd.f32 %v942, %v978
        %v1011 = vadd.f32 %v943, %v979
        %v1012 = vadd.f32 %v944, %v980
        %v1013 = vadd.f32 %v945, %v981
        %v1014 = vadd.f32 %v946, %v982
        %v1015 = vadd.f32 %v947, %v983
        %v1016 = vadd.f32 %v948, %v984
        %v1017 = vadd.f32 %v949, %v985
        %v1018 = vadd.f32 %v950, %v986
        %v1019 = vadd.f32 %v951, %v987
        %v1020 = vadd.f32 %v952, %v988
        %v1021 = vadd.f32 %v953, %v989
        %v1022 = vadd.f32 %v954, %v990
        %v1023 = vadd.f32 %v955, %v991
        %v1024 = vadd.f32 %v956, %v992
        %v1025 = vadd.f32 %v957, %v993
        %v1026 = vadd.f32 %v958, %v994
        %v1027 = vadd.f32 %v959, %v995
        %v1028 = vadd.f32 %v960, %v996
        %v1029 = vadd.f32 %v961, %v997
        %v1030 = vadd.f32 %v962, %v998
        %v1031 = vadd.f32 %v963, %v999
        %v1032 = vadd.f32 %v964, %v1000
        %v1033 = vadd.f32 %v965, %v1001
        %v1034 = vadd.f32 %v966, %v1002
        %v1035 = vadd.f32 %v967, %v1003
        %v1036 = vadd.f32 %v968, %v1004
        %v1037 = vadd.f32 %v969, %v1005
        %v1038 = vlaneseq
        %v1039 = vshrl.u32 %v1038, 7
        %v1040 = vsub.s32 7, %v1039
        %v1041 = vrot.slane %v428, %v1040
        %v1042 = vmul.f32 %v475, %v1041
        %v1043 = vmul.f32 %v495, %v1041
        %v1044 = vmul.f32 %v476, %v1041
        %v1045 = vmul.f32 %v496, %v1041
        %v1046 = vmul.f32 %v477, %v1041
        %v1047 = vmul.f32 %v497, %v1041
        %v1048 = vmul.f32 %v478, %v1041
        %v1049 = vmul.f32 %v498, %v1041
        %v1050 = vmul.f32 %v479, %v1041
        %v1051 = vmul.f32 %v499, %v1041
        %v1052 = vmul.f32 %v480, %v1041
        %v1053 = vmul.f32 %v500, %v1041
        %v1054 = vmul.f32 %v481, %v1041
        %v1055 = vmul.f32 %v501, %v1041
        %v1056 = vmul.f32 %v482, %v1041
        %v1057 = vmul.f32 %v502, %v1041
        %v1058 = vmul.f32 %v485, %v1041
        %v1059 = vmul.f32 %v505, %v1041
        %v1060 = vmul.f32 %v486, %v1041
        %v1061 = vmul.f32 %v506, %v1041
        %v1062 = vmul.f32 %v487, %v1041
        %v1063 = vmul.f32 %v507, %v1041
        %v1064 = vmul.f32 %v488, %v1041
        %v1065 = vmul.f32 %v508, %v1041
        %v1066 = vmul.f32 %v489, %v1041
        %v1067 = vmul.f32 %v509, %v1041
        %v1068 = vmul.f32 %v490, %v1041
        %v1069 = vmul.f32 %v510, %v1041
        %v1070 = vmul.f32 %v491, %v1041
        %v1071 = vmul.f32 %v511, %v1041
        %v1072 = vmul.f32 %v492, %v1041
        %v1073 = vmul.f32 %v512, %v1041
        %v1074 = vadd.f32 %v1006, %v1042
        %v1075 = vadd.f32 %v1007, %v1043
        %v1076 = vadd.f32 %v1008, %v1044
        %v1077 = vadd.f32 %v1009, %v1045
        %v1078 = vadd.f32 %v1010, %v1046
        %v1079 = vadd.f32 %v1011, %v1047
        %v1080 = vadd.f32 %v1012, %v1048
        %v1081 = vadd.f32 %v1013, %v1049
        %v1082 = vadd.f32 %v1014, %v1050
        %v1083 = vadd.f32 %v1015, %v1051
        %v1084 = vadd.f32 %v1016, %v1052
        %v1085 = vadd.f32 %v1017, %v1053
        %v1086 = vadd.f32 %v1018, %v1054
        %v1087 = vadd.f32 %v1019, %v1055
        %v1088 = vadd.f32 %v1020, %v1056
        %v1089 = vadd.f32 %v1021, %v1057
        %v1090 = vadd.f32 %v1022, %v1058
        %v1091 = vadd.f32 %v1023, %v1059
        %v1092 = vadd.f32 %v1024, %v1060
        %v1093 = vadd.f32 %v1025, %v1061
        %v1094 = vadd.f32 %v1026, %v1062
        %v1095 = vadd.f32 %v1027, %v1063
        %v1096 = vadd.f32 %v1028, %v1064
        %v1097 = vadd.f32 %v1029, %v1065
        %v1098 = vadd.f32 %v1030, %v1066
        %v1099 = vadd.f32 %v1031, %v1067
        %v1100 = vadd.f32 %v1032, %v1068
        %v1101 = vadd.f32 %v1033, %v1069
        %v1102 = vadd.f32 %v1034, %v1070
        %v1103 = vadd.f32 %v1035, %v1071
        %v1104 = vadd.f32 %v1036, %v1072
        %v1105 = vadd.f32 %v1037, %v1073
        %v1106 = vlaneseq
        %v1107 = vshrl.u32 %v1106, 7
        %v1108 = vsub.s32 0, %v1107
        %v1109 = vrot.slane %v429, %v1108
        %v1110 = vmul.f32 %v556, %v1109
        %v1111 = vmul.f32 %v576, %v1109
        %v1112 = vmul.f32 %v557, %v1109
        %v1113 = vmul.f32 %v577, %v1109
        %v1114 = vmul.f32 %v558, %v1109
        %v1115 = vmul.f32 %v578, %v1109
        %v1116 = vmul.f32 %v559, %v1109
        %v1117 = vmul.f32 %v579, %v1109
        %v1118 = vmul.f32 %v560, %v1109
        %v1119 = vmul.f32 %v580, %v1109
        %v1120 = vmul.f32 %v561, %v1109
        %v1121 = vmul.f32 %v581, %v1109
        %v1122 = vmul.f32 %v562, %v1109
        %v1123 = vmul.f32 %v582, %v1109
        %v1124 = vmul.f32 %v563, %v1109
        %v1125 = vmul.f32 %v583, %v1109
        %v1126 = vmul.f32 %v566, %v1109
        %v1127 = vmul.f32 %v586, %v1109
        %v1128 = vmul.f32 %v567, %v1109
        %v1129 = vmul.f32 %v587, %v1109
        %v1130 = vmul.f32 %v568, %v1109
        %v1131 = vmul.f32 %v588, %v1109
        %v1132 = vmul.f32 %v569, %v1109
        %v1133 = vmul.f32 %v589, %v1109
        %v1134 = vmul.f32 %v570, %v1109
        %v1135 = vmul.f32 %v590, %v1109
        %v1136 = vmul.f32 %v571, %v1109
        %v1137 = vmul.f32 %v591, %v1109
        %v1138 = vmul.f32 %v572, %v1109
        %v1139 = vmul.f32 %v592, %v1109
        %v1140 = vmul.f32 %v573, %v1109
        %v1141 = vmul.f32 %v593, %v1109
        %v1142 = vadd.f32 %v1074, %v1110
        %v1143 = vadd.f32 %v1075, %v1111
        %v1144 = vadd.f32 %v1076, %v1112
        %v1145 = vadd.f32 %v1077, %v1113
        %v1146 = vadd.f32 %v1078, %v1114
        %v1147 = vadd.f32 %v1079, %v1115
        %v1148 = vadd.f32 %v1080, %v1116
        %v1149 = vadd.f32 %v1081, %v1117
        %v1150 = vadd.f32 %v1082, %v1118
        %v1151 = vadd.f32 %v1083, %v1119
        %v1152 = vadd.f32 %v1084, %v1120
        %v1153 = vadd.f32 %v1085, %v1121
        %v1154 = vadd.f32 %v1086, %v1122
        %v1155 = vadd.f32 %v1087, %v1123
        %v1156 = vadd.f32 %v1088, %v1124
        %v1157 = vadd.f32 %v1089, %v1125
        %v1158 = vadd.f32 %v1090, %v1126
        %v1159 = vadd.f32 %v1091, %v1127
        %v1160 = vadd.f32 %v1092, %v1128
        %v1161 = vadd.f32 %v1093, %v1129
        %v1162 = vadd.f32 %v1094, %v1130
        %v1163 = vadd.f32 %v1095, %v1131
        %v1164 = vadd.f32 %v1096, %v1132
        %v1165 = vadd.f32 %v1097, %v1133
        %v1166 = vadd.f32 %v1098, %v1134
        %v1167 = vadd.f32 %v1099, %v1135
        %v1168 = vadd.f32 %v1100, %v1136
        %v1169 = vadd.f32 %v1101, %v1137
        %v1170 = vadd.f32 %v1102, %v1138
        %v1171 = vadd.f32 %v1103, %v1139
        %v1172 = vadd.f32 %v1104, %v1140
        %v1173 = vadd.f32 %v1105, %v1141
        %v1174 = vld [vmem:[%s299] sm:$0x1]
        %v1176 = vlaneseq
        %v1177 = vshrl.u32 %v1176, 7
        %v1178 = vsub.s32 0, %v1177
        %v1179 = vrot.slane %v1174, %v1178
        %v1181 = vadd.f32 %v1142, %v1179
        %v1182 = vadd.f32 %v1143, %v1179
        %v1183 = vadd.f32 %v1144, %v1179
        %v1184 = vadd.f32 %v1145, %v1179
        %v1185 = vadd.f32 %v1146, %v1179
        %v1186 = vadd.f32 %v1147, %v1179
        %v1187 = vadd.f32 %v1148, %v1179
        %v1188 = vadd.f32 %v1149, %v1179
        %v1189 = vadd.f32 %v1150, %v1179
        %v1190 = vadd.f32 %v1151, %v1179
        %v1191 = vadd.f32 %v1152, %v1179
        %v1192 = vadd.f32 %v1153, %v1179
        %v1193 = vadd.f32 %v1154, %v1179
        %v1194 = vadd.f32 %v1155, %v1179
        %v1195 = vadd.f32 %v1156, %v1179
        %v1196 = vadd.f32 %v1157, %v1179
        %v1197 = vadd.f32 %v1158, %v1179
        %v1198 = vadd.f32 %v1159, %v1179
        %v1199 = vadd.f32 %v1160, %v1179
        %v1200 = vadd.f32 %v1161, %v1179
        %v1201 = vadd.f32 %v1162, %v1179
        %v1202 = vadd.f32 %v1163, %v1179
        %v1203 = vadd.f32 %v1164, %v1179
        %v1204 = vadd.f32 %v1165, %v1179
        %v1205 = vadd.f32 %v1166, %v1179
        %v1206 = vadd.f32 %v1167, %v1179
        %v1207 = vadd.f32 %v1168, %v1179
        %v1208 = vadd.f32 %v1169, %v1179
        %v1209 = vadd.f32 %v1170, %v1179
        %v1210 = vadd.f32 %v1171, %v1179
        %v1211 = vadd.f32 %v1172, %v1179
        %v1212 = vadd.f32 %v1173, %v1179
        %v1213 = vmul.f32 %v1181, 0.5
        %v1214 = vmul.f32 %v1182, 0.5
        %v1215 = vmul.f32 %v1183, 0.5
        %v1216 = vmul.f32 %v1184, 0.5
        %v1217 = vmul.f32 %v1185, 0.5
        %v1218 = vmul.f32 %v1186, 0.5
        %v1219 = vmul.f32 %v1187, 0.5
        %v1220 = vmul.f32 %v1188, 0.5
        %v1221 = vmul.f32 %v1189, 0.5
        %v1222 = vmul.f32 %v1190, 0.5
        %v1223 = vmul.f32 %v1191, 0.5
        %v1224 = vmul.f32 %v1192, 0.5
        %v1225 = vmul.f32 %v1193, 0.5
        %v1226 = vmul.f32 %v1194, 0.5
        %v1227 = vmul.f32 %v1195, 0.5
        %v1228 = vmul.f32 %v1196, 0.5
        %v1229 = vmul.f32 %v1197, 0.5
        %v1230 = vmul.f32 %v1198, 0.5
        %v1231 = vmul.f32 %v1199, 0.5
        %v1232 = vmul.f32 %v1200, 0.5
        %v1233 = vmul.f32 %v1201, 0.5
        %v1234 = vmul.f32 %v1202, 0.5
        %v1235 = vmul.f32 %v1203, 0.5
        %v1236 = vmul.f32 %v1204, 0.5
        %v1237 = vmul.f32 %v1205, 0.5
        %v1238 = vmul.f32 %v1206, 0.5
        %v1239 = vmul.f32 %v1207, 0.5
        %v1240 = vmul.f32 %v1208, 0.5
        %v1241 = vmul.f32 %v1209, 0.5
        %v1242 = vmul.f32 %v1210, 0.5
        %v1243 = vmul.f32 %v1211, 0.5
        %v1244 = vmul.f32 %v1212, 0.5
        %v1245 = vmul.f32 %v1181, 0.70710677
        %v1246 = vmul.f32 %v1182, 0.70710677
        %v1247 = vmul.f32 %v1183, 0.70710677
        %v1248 = vmul.f32 %v1184, 0.70710677
        %v1249 = vmul.f32 %v1185, 0.70710677
        %v1250 = vmul.f32 %v1186, 0.70710677
        %v1251 = vmul.f32 %v1187, 0.70710677
        %v1252 = vmul.f32 %v1188, 0.70710677
        %v1253 = vmul.f32 %v1189, 0.70710677
        %v1254 = vmul.f32 %v1190, 0.70710677
        %v1255 = vmul.f32 %v1191, 0.70710677
        %v1256 = vmul.f32 %v1192, 0.70710677
        %v1257 = vmul.f32 %v1193, 0.70710677
        %v1258 = vmul.f32 %v1194, 0.70710677
        %v1259 = vmul.f32 %v1195, 0.70710677
        %v1260 = vmul.f32 %v1196, 0.70710677
        %v1261 = vmul.f32 %v1197, 0.70710677
        %v1262 = vmul.f32 %v1198, 0.70710677
        %v1263 = vmul.f32 %v1199, 0.70710677
        %v1264 = vmul.f32 %v1200, 0.70710677
        %v1265 = vmul.f32 %v1201, 0.70710677
        %v1266 = vmul.f32 %v1202, 0.70710677
        %v1267 = vmul.f32 %v1203, 0.70710677
        %v1268 = vmul.f32 %v1204, 0.70710677
        %v1269 = vmul.f32 %v1205, 0.70710677
        %v1270 = vmul.f32 %v1206, 0.70710677
        %v1271 = vmul.f32 %v1207, 0.70710677
        %v1272 = vmul.f32 %v1208, 0.70710677
        %v1273 = vmul.f32 %v1209, 0.70710677
        %v1274 = vmul.f32 %v1210, 0.70710677
        %v1275 = vmul.f32 %v1211, 0.70710677
        %v1276 = vmul.f32 %v1212, 0.70710677
        %v1277 = verf.f32.pop %v1245
        %v1278 = verf.f32.pop %v1246
        %v1279 = verf.f32.pop %v1247
        %v1280 = verf.f32.pop %v1248
        %v1281 = verf.f32.pop %v1249
        %v1282 = verf.f32.pop %v1250
        %v1283 = verf.f32.pop %v1251
        %v1284 = verf.f32.pop %v1252
        %v1285 = verf.f32.pop %v1253
        %v1286 = verf.f32.pop %v1254
        %v1287 = verf.f32.pop %v1255
        %v1288 = verf.f32.pop %v1256
        %v1289 = verf.f32.pop %v1257
        %v1290 = verf.f32.pop %v1258
        %v1291 = verf.f32.pop %v1259
        %v1292 = verf.f32.pop %v1260
        %v1293 = verf.f32.pop %v1261
        %v1294 = verf.f32.pop %v1262
        %v1295 = verf.f32.pop %v1263
        %v1296 = verf.f32.pop %v1264
        %v1297 = verf.f32.pop %v1265
        %v1298 = verf.f32.pop %v1266
        %v1299 = verf.f32.pop %v1267
        %v1300 = verf.f32.pop %v1268
        %v1301 = verf.f32.pop %v1269
        %v1302 = verf.f32.pop %v1270
        %v1303 = verf.f32.pop %v1271
        %v1304 = verf.f32.pop %v1272
        %v1305 = verf.f32.pop %v1273
        %v1306 = verf.f32.pop %v1274
        %v1307 = verf.f32.pop %v1275
        %v1308 = verf.f32.pop %v1276
        %v1309 = vadd.f32 %v1277, 1.0
        %v1310 = vadd.f32 %v1278, 1.0
        %v1311 = vadd.f32 %v1279, 1.0
        %v1312 = vadd.f32 %v1280, 1.0
        %v1313 = vadd.f32 %v1281, 1.0
        %v1314 = vadd.f32 %v1282, 1.0
        %v1315 = vadd.f32 %v1283, 1.0
        %v1316 = vadd.f32 %v1284, 1.0
        %v1317 = vadd.f32 %v1285, 1.0
        %v1318 = vadd.f32 %v1286, 1.0
        %v1319 = vadd.f32 %v1287, 1.0
        %v1320 = vadd.f32 %v1288, 1.0
        %v1321 = vadd.f32 %v1289, 1.0
        %v1322 = vadd.f32 %v1290, 1.0
        %v1323 = vadd.f32 %v1291, 1.0
        %v1324 = vadd.f32 %v1292, 1.0
        %v1325 = vadd.f32 %v1293, 1.0
        %v1326 = vadd.f32 %v1294, 1.0
        %v1327 = vadd.f32 %v1295, 1.0
        %v1328 = vadd.f32 %v1296, 1.0
        %v1329 = vadd.f32 %v1297, 1.0
        %v1330 = vadd.f32 %v1298, 1.0
        %v1331 = vadd.f32 %v1299, 1.0
        %v1332 = vadd.f32 %v1300, 1.0
        %v1333 = vadd.f32 %v1301, 1.0
        %v1334 = vadd.f32 %v1302, 1.0
        %v1335 = vadd.f32 %v1303, 1.0
        %v1336 = vadd.f32 %v1304, 1.0
        %v1337 = vadd.f32 %v1305, 1.0
        %v1338 = vadd.f32 %v1306, 1.0
        %v1339 = vadd.f32 %v1307, 1.0
        %v1340 = vadd.f32 %v1308, 1.0
        %v1341 = vmul.f32 %v1213, %v1309
        %v1342 = vmul.f32 %v1214, %v1310
        %v1343 = vmul.f32 %v1215, %v1311
        %v1344 = vmul.f32 %v1216, %v1312
        %v1345 = vmul.f32 %v1217, %v1313
        %v1346 = vmul.f32 %v1218, %v1314
        %v1347 = vmul.f32 %v1219, %v1315
        %v1348 = vmul.f32 %v1220, %v1316
        %v1349 = vmul.f32 %v1221, %v1317
        %v1350 = vmul.f32 %v1222, %v1318
        %v1351 = vmul.f32 %v1223, %v1319
        %v1352 = vmul.f32 %v1224, %v1320
        %v1353 = vmul.f32 %v1225, %v1321
        %v1354 = vmul.f32 %v1226, %v1322
        %v1355 = vmul.f32 %v1227, %v1323
        %v1356 = vmul.f32 %v1228, %v1324
        %v1357 = vmul.f32 %v1229, %v1325
        %v1358 = vmul.f32 %v1230, %v1326
        %v1359 = vmul.f32 %v1231, %v1327
        %v1360 = vmul.f32 %v1232, %v1328
        %v1361 = vmul.f32 %v1233, %v1329
        %v1362 = vmul.f32 %v1234, %v1330
        %v1363 = vmul.f32 %v1235, %v1331
        %v1364 = vmul.f32 %v1236, %v1332
        %v1365 = vmul.f32 %v1237, %v1333
        %v1366 = vmul.f32 %v1238, %v1334
        %v1367 = vmul.f32 %v1239, %v1335
        %v1368 = vmul.f32 %v1240, %v1336
        %v1369 = vmul.f32 %v1241, %v1337
        %v1370 = vmul.f32 %v1242, %v1338
        %v1371 = vmul.f32 %v1243, %v1339
        %v1372 = vmul.f32 %v1244, %v1340
        %v1373 = vadd.s32 %v471, 8
        %vm1374 = vcmp.lt.s32.totalorder %v471, 8
        %vm1375 = vcmp.lt.s32.totalorder %v1373, 8
        %v1376 = vsel %vm1374, 1, 0
        %v1377 = vsel %vm1375, 1, 0
        %vm1378 = vcmp.eq.s32.totalorder %v1376, 1
        %vm1379 = vcmp.eq.s32.totalorder %v1377, 1
        %v1380 = vsel %vm1378, %v1341, 0.0
        %v1381 = vsel %vm1379, %v1342, 0.0
        %v1382 = vsel %vm1378, %v1343, 0.0
        %v1383 = vsel %vm1379, %v1344, 0.0
        %v1384 = vsel %vm1378, %v1345, 0.0
        %v1385 = vsel %vm1379, %v1346, 0.0
        %v1386 = vsel %vm1378, %v1347, 0.0
        %v1387 = vsel %vm1379, %v1348, 0.0
        %v1388 = vsel %vm1378, %v1349, 0.0
        %v1389 = vsel %vm1379, %v1350, 0.0
        %v1390 = vsel %vm1378, %v1351, 0.0
        %v1391 = vsel %vm1379, %v1352, 0.0
        %v1392 = vsel %vm1378, %v1353, 0.0
        %v1393 = vsel %vm1379, %v1354, 0.0
        %v1394 = vsel %vm1378, %v1355, 0.0
        %v1395 = vsel %vm1379, %v1356, 0.0
        %v1396 = vsel %vm1378, %v1357, 0.0
        %v1397 = vsel %vm1379, %v1358, 0.0
        %v1398 = vsel %vm1378, %v1359, 0.0
        %v1399 = vsel %vm1379, %v1360, 0.0
        %v1400 = vsel %vm1378, %v1361, 0.0
        %v1401 = vsel %vm1379, %v1362, 0.0
        %v1402 = vsel %vm1378, %v1363, 0.0
        %v1403 = vsel %vm1379, %v1364, 0.0
        %v1404 = vsel %vm1378, %v1365, 0.0
        %v1405 = vsel %vm1379, %v1366, 0.0
        %v1406 = vsel %vm1378, %v1367, 0.0
        %v1407 = vsel %vm1379, %v1368, 0.0
        %v1408 = vsel %vm1378, %v1369, 0.0
        %v1409 = vsel %vm1379, %v1370, 0.0
        %v1410 = vsel %vm1378, %v1371, 0.0
        %v1411 = vsel %vm1379, %v1372, 0.0
        %v1412 = vsel %vm346, %v1380, 0.0
        %v1413 = vsel %vm346, %v1381, 0.0
        %v1414 = vadd.f32 %v1412, %v1413
        %v1415 = vsel %vm346, %v1382, 0.0
        %v1416 = vadd.f32 %v1414, %v1415
        %v1417 = vsel %vm346, %v1383, 0.0
        %v1418 = vadd.f32 %v1416, %v1417
        %v1419 = vsel %vm346, %v1384, 0.0
        %v1420 = vadd.f32 %v1418, %v1419
        %v1421 = vsel %vm346, %v1385, 0.0
        %v1422 = vadd.f32 %v1420, %v1421
        %v1423 = vsel %vm346, %v1386, 0.0
        %v1424 = vadd.f32 %v1422, %v1423
        %v1425 = vsel %vm346, %v1387, 0.0
        %v1426 = vadd.f32 %v1424, %v1425
        %v1427 = vsel %vm346, %v1388, 0.0
        %v1428 = vadd.f32 %v1426, %v1427
        %v1429 = vsel %vm346, %v1389, 0.0
        %v1430 = vadd.f32 %v1428, %v1429
        %v1431 = vsel %vm346, %v1390, 0.0
        %v1432 = vadd.f32 %v1430, %v1431
        %v1433 = vsel %vm346, %v1391, 0.0
        %v1434 = vadd.f32 %v1432, %v1433
        %v1435 = vsel %vm346, %v1392, 0.0
        %v1436 = vadd.f32 %v1434, %v1435
        %v1437 = vsel %vm346, %v1393, 0.0
        %v1438 = vadd.f32 %v1436, %v1437
        %v1439 = vsel %vm346, %v1394, 0.0
        %v1440 = vadd.f32 %v1438, %v1439
        %v1441 = vsel %vm346, %v1395, 0.0
        %v1442 = vadd.f32 %v1440, %v1441
        %v1443 = vrot.slane %v1442, 4
        %v1444 = vadd.f32 %v1442, %v1443
        %v1445 = vrot.slane %v1444, 2
        %v1446 = vadd.f32 %v1444, %v1445
        %v1447 = vrot.slane %v1446, 1
        %v1448 = vadd.f32 %v1446, %v1447
        %v1449 = vsel %vm346, %v1396, 0.0
        %v1450 = vsel %vm346, %v1397, 0.0
        %v1451 = vadd.f32 %v1449, %v1450
        %v1452 = vsel %vm346, %v1398, 0.0
        %v1453 = vadd.f32 %v1451, %v1452
        %v1454 = vsel %vm346, %v1399, 0.0
        %v1455 = vadd.f32 %v1453, %v1454
        %v1456 = vsel %vm346, %v1400, 0.0
        %v1457 = vadd.f32 %v1455, %v1456
        %v1458 = vsel %vm346, %v1401, 0.0
        %v1459 = vadd.f32 %v1457, %v1458
        %v1460 = vsel %vm346, %v1402, 0.0
        %v1461 = vadd.f32 %v1459, %v1460
        %v1462 = vsel %vm346, %v1403, 0.0
        %v1463 = vadd.f32 %v1461, %v1462
        %v1464 = vsel %vm346, %v1404, 0.0
        %v1465 = vadd.f32 %v1463, %v1464
        %v1466 = vsel %vm346, %v1405, 0.0
        %v1467 = vadd.f32 %v1465, %v1466
        %v1468 = vsel %vm346, %v1406, 0.0
        %v1469 = vadd.f32 %v1467, %v1468
        %v1470 = vsel %vm346, %v1407, 0.0
        %v1471 = vadd.f32 %v1469, %v1470
        %v1472 = vsel %vm346, %v1408, 0.0
        %v1473 = vadd.f32 %v1471, %v1472
        %v1474 = vsel %vm346, %v1409, 0.0
        %v1475 = vadd.f32 %v1473, %v1474
        %v1476 = vsel %vm346, %v1410, 0.0
        %v1477 = vadd.f32 %v1475, %v1476
        %v1478 = vsel %vm346, %v1411, 0.0
        %v1479 = vadd.f32 %v1477, %v1478
        %v1480 = vrot.slane %v1479, 4
        %v1481 = vadd.f32 %v1479, %v1480
        %v1482 = vrot.slane %v1481, 2
        %v1483 = vadd.f32 %v1481, %v1482
        %v1484 = vrot.slane %v1483, 1
        %v1485 = vadd.f32 %v1483, %v1484
        %v1486 = vmul.f32 %v1380, %v1380
        %v1487 = vmul.f32 %v1381, %v1381
        %v1488 = vmul.f32 %v1382, %v1382
        %v1489 = vmul.f32 %v1383, %v1383
        %v1490 = vmul.f32 %v1384, %v1384
        %v1491 = vmul.f32 %v1385, %v1385
        %v1492 = vmul.f32 %v1386, %v1386
        %v1493 = vmul.f32 %v1387, %v1387
        %v1494 = vmul.f32 %v1388, %v1388
        %v1495 = vmul.f32 %v1389, %v1389
        %v1496 = vmul.f32 %v1390, %v1390
        %v1497 = vmul.f32 %v1391, %v1391
        %v1498 = vmul.f32 %v1392, %v1392
        %v1499 = vmul.f32 %v1393, %v1393
        %v1500 = vmul.f32 %v1394, %v1394
        %v1501 = vmul.f32 %v1395, %v1395
        %v1502 = vmul.f32 %v1396, %v1396
        %v1503 = vmul.f32 %v1397, %v1397
        %v1504 = vmul.f32 %v1398, %v1398
        %v1505 = vmul.f32 %v1399, %v1399
        %v1506 = vmul.f32 %v1400, %v1400
        %v1507 = vmul.f32 %v1401, %v1401
        %v1508 = vmul.f32 %v1402, %v1402
        %v1509 = vmul.f32 %v1403, %v1403
        %v1510 = vmul.f32 %v1404, %v1404
        %v1511 = vmul.f32 %v1405, %v1405
        %v1512 = vmul.f32 %v1406, %v1406
        %v1513 = vmul.f32 %v1407, %v1407
        %v1514 = vmul.f32 %v1408, %v1408
        %v1515 = vmul.f32 %v1409, %v1409
        %v1516 = vmul.f32 %v1410, %v1410
        %v1517 = vmul.f32 %v1411, %v1411
        %v1518 = vsel %vm346, %v1486, 0.0
        %v1519 = vsel %vm346, %v1487, 0.0
        %v1520 = vadd.f32 %v1518, %v1519
        %v1521 = vsel %vm346, %v1488, 0.0
        %v1522 = vadd.f32 %v1520, %v1521
        %v1523 = vsel %vm346, %v1489, 0.0
        %v1524 = vadd.f32 %v1522, %v1523
        %v1525 = vsel %vm346, %v1490, 0.0
        %v1526 = vadd.f32 %v1524, %v1525
        %v1527 = vsel %vm346, %v1491, 0.0
        %v1528 = vadd.f32 %v1526, %v1527
        %v1529 = vsel %vm346, %v1492, 0.0
        %v1530 = vadd.f32 %v1528, %v1529
        %v1531 = vsel %vm346, %v1493, 0.0
        %v1532 = vadd.f32 %v1530, %v1531
        %v1533 = vsel %vm346, %v1494, 0.0
        %v1534 = vadd.f32 %v1532, %v1533
        %v1535 = vsel %vm346, %v1495, 0.0
        %v1536 = vadd.f32 %v1534, %v1535
        %v1537 = vsel %vm346, %v1496, 0.0
        %v1538 = vadd.f32 %v1536, %v1537
        %v1539 = vsel %vm346, %v1497, 0.0
        %v1540 = vadd.f32 %v1538, %v1539
        %v1541 = vsel %vm346, %v1498, 0.0
        %v1542 = vadd.f32 %v1540, %v1541
        %v1543 = vsel %vm346, %v1499, 0.0
        %v1544 = vadd.f32 %v1542, %v1543
        %v1545 = vsel %vm346, %v1500, 0.0
        %v1546 = vadd.f32 %v1544, %v1545
        %v1547 = vsel %vm346, %v1501, 0.0
        %v1548 = vadd.f32 %v1546, %v1547
        %v1549 = vrot.slane %v1548, 4
        %v1550 = vadd.f32 %v1548, %v1549
        %v1551 = vrot.slane %v1550, 2
        %v1552 = vadd.f32 %v1550, %v1551
        %v1553 = vrot.slane %v1552, 1
        %v1554 = vadd.f32 %v1552, %v1553
        %v1555 = vsel %vm346, %v1502, 0.0
        %v1556 = vsel %vm346, %v1503, 0.0
        %v1557 = vadd.f32 %v1555, %v1556
        %v1558 = vsel %vm346, %v1504, 0.0
        %v1559 = vadd.f32 %v1557, %v1558
        %v1560 = vsel %vm346, %v1505, 0.0
        %v1561 = vadd.f32 %v1559, %v1560
        %v1562 = vsel %vm346, %v1506, 0.0
        %v1563 = vadd.f32 %v1561, %v1562
        %v1564 = vsel %vm346, %v1507, 0.0
        %v1565 = vadd.f32 %v1563, %v1564
        %v1566 = vsel %vm346, %v1508, 0.0
        %v1567 = vadd.f32 %v1565, %v1566
        %v1568 = vsel %vm346, %v1509, 0.0
        %v1569 = vadd.f32 %v1567, %v1568
        %v1570 = vsel %vm346, %v1510, 0.0
        %v1571 = vadd.f32 %v1569, %v1570
        %v1572 = vsel %vm346, %v1511, 0.0
        %v1573 = vadd.f32 %v1571, %v1572
        %v1574 = vsel %vm346, %v1512, 0.0
        %v1575 = vadd.f32 %v1573, %v1574
        %v1576 = vsel %vm346, %v1513, 0.0
        %v1577 = vadd.f32 %v1575, %v1576
        %v1578 = vsel %vm346, %v1514, 0.0
        %v1579 = vadd.f32 %v1577, %v1578
        %v1580 = vsel %vm346, %v1515, 0.0
        %v1581 = vadd.f32 %v1579, %v1580
        %v1582 = vsel %vm346, %v1516, 0.0
        %v1583 = vadd.f32 %v1581, %v1582
        %v1584 = vsel %vm346, %v1517, 0.0
        %v1585 = vadd.f32 %v1583, %v1584
        %v1586 = vrot.slane %v1585, 4
        %v1587 = vadd.f32 %v1585, %v1586
        %v1588 = vrot.slane %v1587, 2
        %v1589 = vadd.f32 %v1587, %v1588
        %v1590 = vrot.slane %v1589, 1
        %v1591 = vadd.f32 %v1589, %v1590
        %s1592 = smul.u32 %s26, 2
        %s1593 = ssub.s32 3, %s1592
        %p1594 = scmp.lt.s32.totalorder %s1593, 2
        %s1595 = scalar_select %p1594, %s1593, 2
        %v1596 = vstv %s1595
        %vm1597 = vcmp.lt.s32.totalorder %v471, %v1596
        %vm1600 = vcmask 1041409
        %v1601 = vsel %vm1600, %v1485, %v1448
        %v1603 = vsel %vm1597, %v1601, 0.0
        %v1606 = vsel %vm1600, %v1591, %v1554
        %v1608 = vsel %vm1597, %v1606, 0.0
        %v1609 = vsel %vm348, %v1603, 0.0
        %v1610 = vrot.slane %v1609, 4
        %v1611 = vadd.f32 %v1609, %v1610
        %v1612 = vrot.slane %v1611, 2
        %v1613 = vadd.f32 %v1611, %v1612
        %v1614 = vrot.slane %v1613, 1
        %v1615 = vadd.f32 %v1613, %v1614
        %vm1616 = vcmask 122880
        %1617 = vst.msk [vmem:[%s270] sm:$0x1] %vm1616, %v1615
        %v1618 = vsel %vm348, %v1608, 0.0
        %v1619 = vrot.slane %v1618, 4
        %v1620 = vadd.f32 %v1618, %v1619
        %v1621 = vrot.slane %v1620, 2
        %v1622 = vadd.f32 %v1620, %v1621
        %v1623 = vrot.slane %v1622, 1
        %v1624 = vadd.f32 %v1622, %v1623
        %1625 = vst.msk [vmem:[%s270 + $0x1] sm:$0x1] %vm1616, %v1624
        %v1626 = vpack.c.bf16 %v1341, %v1341
        %v1627 = vpack.c.bf16 %v1343, %v1343
        %v1628 = vpack.c.bf16 %v1345, %v1345
        %v1629 = vpack.c.bf16 %v1347, %v1347
        %v1630 = vpack.c.bf16 %v1349, %v1349
        %v1631 = vpack.c.bf16 %v1351, %v1351
        %v1632 = vpack.c.bf16 %v1353, %v1353
        %v1633 = vpack.c.bf16 %v1355, %v1355
        %v1634 = vpack.c.bf16 %v1357, %v1357
        %v1635 = vpack.c.bf16 %v1359, %v1359
        %v1636 = vpack.c.bf16 %v1361, %v1361
        %v1637 = vpack.c.bf16 %v1363, %v1363
        %v1638 = vpack.c.bf16 %v1365, %v1365
        %v1639 = vpack.c.bf16 %v1367, %v1367
        %v1640 = vpack.c.bf16 %v1369, %v1369
        %v1641 = vpack.c.bf16 %v1371, %v1371
        %vm1642 = vcmask 125952
        %1643 = vst.msk [vmem:[%s263] sm:$0xf] %vm1642, %v1626
        %1644 = vst.msk [vmem:[%s263 + $0x4] sm:$0xf] %vm1642, %v1627
        %1645 = vst.msk [vmem:[%s263 + $0x8] sm:$0xf] %vm1642, %v1628
        %1646 = vst.msk [vmem:[%s263 + $0xc] sm:$0xf] %vm1642, %v1629
        %1647 = vst.msk [vmem:[%s263 + $0x10] sm:$0xf] %vm1642, %v1630
        %1648 = vst.msk [vmem:[%s263 + $0x14] sm:$0xf] %vm1642, %v1631
        %1649 = vst.msk [vmem:[%s263 + $0x18] sm:$0xf] %vm1642, %v1632
        %1650 = vst.msk [vmem:[%s263 + $0x1c] sm:$0xf] %vm1642, %v1633
        %1651 = vst.msk [vmem:[%s263 + $0x20] sm:$0xf] %vm1642, %v1634
        %1652 = vst.msk [vmem:[%s263 + $0x24] sm:$0xf] %vm1642, %v1635
        %1653 = vst.msk [vmem:[%s263 + $0x28] sm:$0xf] %vm1642, %v1636
        %1654 = vst.msk [vmem:[%s263 + $0x2c] sm:$0xf] %vm1642, %v1637
        %1655 = vst.msk [vmem:[%s263 + $0x30] sm:$0xf] %vm1642, %v1638
        %1656 = vst.msk [vmem:[%s263 + $0x34] sm:$0xf] %vm1642, %v1639
        %1657 = vst.msk [vmem:[%s263 + $0x38] sm:$0xf] %vm1642, %v1640
        %1658 = vst.msk [vmem:[%s263 + $0x3c] sm:$0xf] %vm1642, %v1641
        %s1659 = sand.u32 %s124, 1
        %s1660 = scalar_lea.sflag [#allocation4], %s1659
        %s1661 = sand.u32 %s124, 1
        %s1662 = smul.addr %s1661, 64
        %s1663 = scalar_lea.vmem [#allocation3], %s1662
        %s1664 = sand.u32 %s152, 1
        %s1665 = scalar_lea.sflag [#allocation6], %s1664
        %s1666 = sand.u32 %s152, 1
        %s1667 = smul.addr %s1666, 2
        %s1668 = scalar_lea.vmem [#allocation5], %s1667
        // Predicated region
        $region33: #{tpu_custom_call.1} parent=31 // pred_check
          %p1669 = pneg %p134
        $region34: #{tpu_custom_call.1} parent=31 // pred_check_branch
          %1671 = sbr.rel (%p1669) target = $region36
        $region35: #{tpu_custom_call.1} parent=31 // pred_region
          %s1672 = smul.u32 2, %s26
          %s1673 = ssub.s32 3, %s1672
          %p1674 = scmp.lt.s32.totalorder %s1673, 2
          %s1675 = scalar_select %p1674, %s1673, 2
          %s1676 = smul.u32 64, %s1675
          %s1677 = smul.u32 %s1676, 8
          %s1679 = ssub.s32 1024, %s1677
          %1680 = vsyncadd %s1660, %s1679
          %p1681 = scmp.ne.s32.totalorder 0, %s1677
          %s1682 = smul.addr %s1672, 8
          %s1683 = sadd.s32 %s27, %s1682
          %s1684 = smul.addr %s1683, 64
          %s1685 = scalar_lea.hbm %s3, %s1684
          %s1686 = smul.u32 %s1675, 8
          %s1687 = smul.u32 4, %s1686
          %s1688 = sshll.u32 %s1663, 4
          %s1689 = int_to_ptr.vmem [resolvable:$true] %s1688
          %s1690 = sshll.u32 %s1687, 4
          %1694 = dma.vmem_to_hbm [thread:$0]  (%p1681), %s1689, %s1690, %s1685, %s1660, 64, 64, 4
        $region36: #{tpu_custom_call.1} parent=31 // pred_fallthru
          _
        // Predicated region
        $region37: #{tpu_custom_call.1} parent=31 // pred_check
          %p1695 = pneg %p162
        $region38: #{tpu_custom_call.1} parent=31 // pred_check_branch
          %1697 = sbr.rel (%p1695) target = $region40
        $region39: #{tpu_custom_call.1} parent=31 // pred_region
          %s1699 = ssub.s32 32, 32
          %1700 = vsyncadd %s1665, %s1699
          %s1701 = sadd.s32 %s27, %s26
          %s1702 = smul.addr %s1701, 32
          %s1703 = scalar_lea.hbm %s4, %s1702
          %s1705 = sshll.u32 %s1668, 4
          %s1706 = int_to_ptr.vmem [resolvable:$true] %s1705
          %1708 = dma.vmem_to_hbm [thread:$0]  %s1706, 32, %s1703, %s1665
        $region40: #{tpu_custom_call.1} parent=31 // pred_fallthru
          _
      $region32: #{tpu_custom_call.1} parent=5 // pred_fallthru
        _
      %p1709 = scmp.le.s32.totalorder 2, %s17
      // Predicated region
      $region41: #{tpu_custom_call.1} parent=5 // pred_check
        %p1710 = pneg %p1709
      $region42: #{tpu_custom_call.1} parent=5 // pred_check_branch
        %1712 = sbr.rel (%p1710) target = $region44
      $region43: #{tpu_custom_call.1} parent=5 // pred_region
        %s1713 = ssub.s32 %s17, 2
        // Predicated region
        $region45: #{tpu_custom_call.1} parent=43 // pred_check
          %p1714 = pneg %p140
        $region46: #{tpu_custom_call.1} parent=43 // pred_check_branch
          %1716 = sbr.rel (%p1714) target = $region48
        $region47: #{tpu_custom_call.1} parent=43 // pred_region
          %s1717 = sand.u32 %s125, 1
          %s1718 = scalar_lea.sflag [#allocation4], %s1717
          %s1719 = sand.u32 %s125, 1
          %s1720 = smul.addr %s1719, 64
          %s1721 = scalar_lea.vmem [#allocation3], %s1720
          %1722 = dma.done %s1718, 1024
        $region48: #{tpu_custom_call.1} parent=43 // pred_fallthru
          _
        // Predicated region
        $region49: #{tpu_custom_call.1} parent=43 // pred_check
          %p1723 = pneg %p168
        $region50: #{tpu_custom_call.1} parent=43 // pred_check_branch
          %1725 = sbr.rel (%p1723) target = $region52
        $region51: #{tpu_custom_call.1} parent=43 // pred_region
          %s1726 = sand.u32 %s153, 1
          %s1727 = scalar_lea.sflag [#allocation6], %s1726
          %s1728 = sand.u32 %s153, 1
          %s1729 = smul.addr %s1728, 2
          %s1730 = scalar_lea.vmem [#allocation5], %s1729
          %1731 = dma.done %s1727, 32
        $region52: #{tpu_custom_call.1} parent=43 // pred_fallthru
          _
      $region44: #{tpu_custom_call.1} parent=5 // pred_fallthru
        _
    $region6: #{tpu_custom_call.1} parent=1 // loop_footer
      %s21 = sadd.s32 1, %s17
    $region7: #{tpu_custom_call.1} parent=1 // loop_footer_branch
      %16 = sbr.rel target = $region3
    $region8: #{tpu_custom_call.1} parent=1 // loop_exit
      _
    %1732 = vsyncpa [#allocation4], 1
    %s1733 = scalar_lea.sflag [#allocation4], 1
    %1734 = vsyncpa %s1733, 1
    %1735 = vsyncpa [#allocation6], 1
    %s1736 = scalar_lea.sflag [#allocation6], 1
    %1737 = vsyncpa %s1736, 1

</llo_original>
